<compile_context>
chip_gen: v7x
topology: tpu7x:2x2x1
jax: 0.10.0
libtpu: 0.0.40
codegen_flags: <defaults>
</compile_context>

<pallas_src>
import math

import jax
import jax.numpy as jnp
from jax.experimental import pallas as pl

# ---- static model config (small, TPU-friendly) ----
B = 2                      # batch
N = 8                      # sequence length (tokens)
C = 32                     # embed dim
NUM_HEADS = 4
HEAD_DIM = C // NUM_HEADS                  # 8
MLP_HIDDEN = int(C * 4.0)                  # 128
SCALE = HEAD_DIM ** (-0.5)
EPS = 1e-6

ROWS = B * N                               # 16 token rows
ZB = NUM_HEADS * B                         # 8 (head, batch) pairs
PACK = 128 // C                            # 4 tokens per lane-dense output row
OUT_SLAB = (PACK, (ROWS // PACK) * C)      # (4, 128) packed `out`
ATTN_SLAB = (N // 2, 2 * ZB * N)           # (4, 128) packed `attn`

# rows of the packed (8, 128) vector-parameter slab
_LN1G, _LN1B, _BPROJ, _LN2G, _LN2B, _B2, _B1 = range(7)


def _layernorm(v, g, b):
    mu = jnp.mean(v, axis=-1, keepdims=True)
    var = jnp.mean((v - mu) ** 2, axis=-1, keepdims=True)
    return (v - mu) * jax.lax.rsqrt(var + EPS) * g + b


def _gelu_exact(v):
    # nn.GELU() default = exact erf formulation
    return 0.5 * v * (1.0 + jax.lax.erf(v * (1.0 / math.sqrt(2.0))))


def block_kernel(x_ref, vec_ref, wqkv_ref, wproj_ref, w1_ref, w2_ref,
                 out_ref, attn_ref):
    x = x_ref[...]                                    # (ROWS, C), rows = (b, n)

    vecs = vec_ref[...]                               # (8, 128) packed vectors
    ln1g = vecs[_LN1G:_LN1G + 1, :C]
    ln1b = vecs[_LN1B:_LN1B + 1, :C]
    bproj = vecs[_BPROJ:_BPROJ + 1, :C]
    ln2g = vecs[_LN2G:_LN2G + 1, :C]
    ln2b = vecs[_LN2B:_LN2B + 1, :C]
    b2 = vecs[_B2:_B2 + 1, :C]
    b1 = vecs[_B1:_B1 + 1, :]                         # (1, 128)

    # ---- norm1 + fused qkv projection (one row-batched matmul) ----
    xn = _layernorm(x, ln1g, ln1b)
    qkv = jnp.dot(xn, wqkv_ref[...],
                  preferred_element_type=jnp.float32)               # (ROWS, 3C)

    # ---- gather heads: (ROWS, 3C) -> (H*B, N, hd), batch index z = h*B + b --
    def heads(base):
        parts = [
            qkv[:, base + h * HEAD_DIM: base + (h + 1) * HEAD_DIM]
            .reshape(1, B, N, HEAD_DIM)
            for h in range(NUM_HEADS)
        ]
        return jnp.concatenate(parts, axis=0).reshape(ZB, N, HEAD_DIM)

    q = heads(0)
    k = heads(C)
    v = heads(2 * C)

    # ---- scores + softmax, one batched contraction over all (head,batch) ----
    s = jnp.einsum('znd,zmd->znm', q, k,
                   preferred_element_type=jnp.float32) * SCALE      # (ZB, N, N)
    s = s - jnp.max(s, axis=-1, keepdims=True)
    p = jnp.exp(s)
    denom = jnp.sum(p, axis=-1, keepdims=True)
    r = pl.reciprocal(denom, approx=True)            # EUP vrcp (free slot)
    r = r * (2.0 - denom * r)                        # 1 Newton step -> f32-accurate
    p = p * r                                        # softmax, (ZB, N, N)

    # ---- single lane-dense attention store: pack (ZB, N, N) -> (4, 128) ----
    half = jnp.concatenate([p[z] for z in range(ZB)], axis=1)       # (N, ZB*N)=(8,64)
    attn_ref[...] = jnp.concatenate([half[:N // 2, :], half[N // 2:, :]], axis=1)

    # ---- weighted sum + head concat + ONE output projection ----
    o = jnp.einsum('znm,zmd->znd', p, v,
                   preferred_element_type=jnp.float32)              # (ZB, N, hd)
    o = o.reshape(NUM_HEADS, B, N, HEAD_DIM)
    o_cat = jnp.concatenate(
        [o[h].reshape(ROWS, HEAD_DIM) for h in range(NUM_HEADS)], axis=1)  # (ROWS,C)
    y = jnp.dot(o_cat, wproj_ref[...],
                preferred_element_type=jnp.float32) + bproj

    x1 = x + y                                                      # residual 1

    # ---- norm2 + MLP ----
    xn2 = _layernorm(x1, ln2g, ln2b)
    h1 = _gelu_exact(jnp.dot(xn2, w1_ref[...],
                             preferred_element_type=jnp.float32) + b1)
    h2 = jnp.dot(h1, w2_ref[...],
                 preferred_element_type=jnp.float32) + b2
    res = x1 + h2                                                   # residual 2

    # ---- lane-dense output store: pack (ROWS, C) -> (4, 128) ----
    out_ref[...] = jnp.concatenate(
        [res[PACK * j: PACK * (j + 1), :] for j in range(ROWS // PACK)], axis=1)


def _pack_vectors(ln1g, ln1b, bproj, ln2g, ln2b, b2, b1):
    """Pack the 7 small vector params into one (8, 128) slab (wrapper-side)."""
    vec = jnp.zeros((8, 128), jnp.float32)
    vec = vec.at[_LN1G, :C].set(ln1g.reshape(-1))
    vec = vec.at[_LN1B, :C].set(ln1b.reshape(-1))
    vec = vec.at[_BPROJ, :C].set(bproj.reshape(-1))
    vec = vec.at[_LN2G, :C].set(ln2g.reshape(-1))
    vec = vec.at[_LN2B, :C].set(ln2b.reshape(-1))
    vec = vec.at[_B2, :C].set(b2.reshape(-1))
    vec = vec.at[_B1, :MLP_HIDDEN].set(b1.reshape(-1))
    return vec


@jax.jit
def block_forward(x, params):
    """x: (B, N, C) float32. Returns (x_out (B,N,C), attn (B,H,N,N))."""
    (ln1g, ln1b, wqkv, wproj, bproj, ln2g, ln2b, w1, b1, w2, b2) = params
    vec = _pack_vectors(ln1g, ln1b, bproj, ln2g, ln2b, b2, b1)
    x_flat = x.reshape(ROWS, C)                      # wrapper-side flatten (free)

    flops = 2 * B * N * (3 * C * C + 2 * N * C + C * C + 2 * C * MLP_HIDDEN)
    transcendentals = B * N * (NUM_HEADS * N + MLP_HIDDEN)
    bytes_accessed = 4 * (x.size + vec.size + wqkv.size + wproj.size
                          + w1.size + w2.size + 2 * 4 * 128)

    # Single grid-less invocation: whole-array VMEM blocks (~60 KB total).
    # TODO(synk): at real ViT dims (C=768, MLP=3072) add a token-tile grid axis
    # with dimension_semantics=("parallel",) so v7x's second TensorCore is used,
    # cast matmul operands to bf16 on v6e/v7x, and tile the MLP K-dim against
    # the per-generation VMEM budget (64 MiB v7x, 16 MiB scoped default v5e).
    out_flat, attn_flat = pl.pallas_call(
        block_kernel,
        out_shape=(
            jax.ShapeDtypeStruct(OUT_SLAB, jnp.float32),    # (4, 128)
            jax.ShapeDtypeStruct(ATTN_SLAB, jnp.float32),   # (4, 128)
        ),
        cost_estimate=pl.CostEstimate(
            flops=flops,
            transcendentals=transcendentals,
            bytes_accessed=bytes_accessed),
    )(x_flat, vec, wqkv, wproj, w1, w2)

    # Un-pack the lane-dense slabs (free XLA layout plumbing).
    out = (out_flat.reshape(PACK, ROWS // PACK, C)
           .transpose(1, 0, 2).reshape(B, N, C))
    attn = (attn_flat.reshape(N // 2, 2, ZB, N)
            .transpose(2, 1, 0, 3)
            .reshape(NUM_HEADS, B, N, N)
            .transpose(1, 0, 2, 3))
    return out, attn


def init_params(key):
    ks = jax.random.split(key, 8)
    s = 0.02
    ln1g = jnp.ones((1, C), jnp.float32)
    ln1b = jnp.zeros((1, C), jnp.float32)
    wqkv = s * jax.random.normal(ks[0], (C, 3 * C), jnp.float32)   # qkv_bias=False
    wproj = s * jax.random.normal(ks[1], (C, C), jnp.float32)
    bproj = s * jax.random.normal(ks[2], (1, C), jnp.float32)
    ln2g = jnp.ones((1, C), jnp.float32)
    ln2b = jnp.zeros((1, C), jnp.float32)
    w1 = s * jax.random.normal(ks[3], (C, MLP_HIDDEN), jnp.float32)
    b1 = s * jax.random.normal(ks[4], (1, MLP_HIDDEN), jnp.float32)
    w2 = s * jax.random.normal(ks[5], (MLP_HIDDEN, C), jnp.float32)
    b2 = s * jax.random.normal(ks[6], (1, C), jnp.float32)
    return (ln1g, ln1b, wqkv, wproj, bproj, ln2g, ln2b, w1, b1, w2, b2)


def block_reference(x, params):
    """Pure-JAX reference mirroring the PyTorch forward, for validation."""
    (ln1g, ln1b, wqkv, wproj, bproj, ln2g, ln2b, w1, b1, w2, b2) = params

    xn = _layernorm(x, ln1g, ln1b)                                    # (B,N,C)
    qkv = xn @ wqkv                                                   # (B,N,3C)
    qkv = qkv.reshape(B, N, 3, NUM_HEADS, HEAD_DIM).transpose(2, 0, 3, 1, 4)
    q, k, v = qkv[0], qkv[1], qkv[2]                                  # (B,H,N,hd)
    attn = jnp.einsum('bhnd,bhmd->bhnm', q, k) * SCALE
    attn = jax.nn.softmax(attn, axis=-1)
    y = jnp.einsum('bhnm,bhmd->bhnd', attn, v).transpose(0, 2, 1, 3).reshape(B, N, C)
    y = y @ wproj + bproj
    x1 = x + y
    xn2 = _layernorm(x1, ln2g, ln2b)
    h = _gelu_exact(xn2 @ w1 + b1)
    out = x1 + (h @ w2 + b2)
    return out, attn


if __name__ == "__main__":
    key = jax.random.PRNGKey(0)
    kx, kp = jax.random.split(key)
    x = jax.random.normal(kx, (B, N, C), jnp.float32)
    params = init_params(kp)

    out, attn = block_forward(x, params)
    out, attn = jax.block_until_ready((out, attn))

    ref_out, ref_attn = block_reference(x, params)
    assert jnp.allclose(out, ref_out, rtol=1e-4, atol=1e-4)
    assert jnp.allclose(attn, ref_attn, rtol=1e-4, atol=1e-4)

    print("KERNEL_OK")
</pallas_src>

<mosaic_0001>
module attributes {stable_mosaic.version = 11 : i64} {
  func.func @block_kernel(%arg0: memref<16x32xf32, #tpu.memory_space<vmem>>, %arg1: memref<8x128xf32, #tpu.memory_space<vmem>>, %arg2: memref<32x96xf32, #tpu.memory_space<vmem>>, %arg3: memref<32x32xf32, #tpu.memory_space<vmem>>, %arg4: memref<32x128xf32, #tpu.memory_space<vmem>>, %arg5: memref<128x32xf32, #tpu.memory_space<vmem>>, %arg6: memref<4x128xf32, #tpu.memory_space<vmem>>, %arg7: memref<4x128xf32, #tpu.memory_space<vmem>>) attributes {dimension_semantics = [], scalar_prefetch = 0 : i64, scratch_operands = 0 : i64, tpu.core_type = #tpu.core_type<tc>} {
    %c0 = arith.constant 0 : index
    %c0_0 = arith.constant 0 : index
    %0 = vector.load %arg0[%c0, %c0_0] : memref<16x32xf32, #tpu.memory_space<vmem>>, vector<16x32xf32>
    %c0_1 = arith.constant 0 : index
    %c0_2 = arith.constant 0 : index
    %1 = vector.load %arg1[%c0_1, %c0_2] : memref<8x128xf32, #tpu.memory_space<vmem>>, vector<8x128xf32>
    %2 = vector.extract_strided_slice %1 {offsets = [0, 0], sizes = [1, 32], strides = [1, 1]} : vector<8x128xf32> to vector<1x32xf32>
    %3 = vector.extract_strided_slice %1 {offsets = [1, 0], sizes = [1, 32], strides = [1, 1]} : vector<8x128xf32> to vector<1x32xf32>
    %4 = vector.extract_strided_slice %1 {offsets = [2, 0], sizes = [1, 32], strides = [1, 1]} : vector<8x128xf32> to vector<1x32xf32>
    %5 = vector.extract_strided_slice %1 {offsets = [3, 0], sizes = [1, 32], strides = [1, 1]} : vector<8x128xf32> to vector<1x32xf32>
    %6 = vector.extract_strided_slice %1 {offsets = [4, 0], sizes = [1, 32], strides = [1, 1]} : vector<8x128xf32> to vector<1x32xf32>
    %7 = vector.extract_strided_slice %1 {offsets = [5, 0], sizes = [1, 32], strides = [1, 1]} : vector<8x128xf32> to vector<1x32xf32>
    %8 = vector.extract_strided_slice %1 {offsets = [6, 0], sizes = [1, 128], strides = [1, 1]} : vector<8x128xf32> to vector<1x128xf32>
    %cst = arith.constant dense<0.000000e+00> : vector<16xf32>
    %9 = vector.multi_reduction <add>, %0, %cst [1] : vector<16x32xf32> to vector<16xf32>
    %10 = vector.shape_cast %9 : vector<16xf32> to vector<16x1xf32>
    %cst_3 = arith.constant 3.200000e+01 : f32
    %11 = vector.broadcast %cst_3 : f32 to vector<16x1xf32>
    %12 = arith.divf %10, %11 : vector<16x1xf32>
    %13 = vector.broadcast %12 : vector<16x1xf32> to vector<16x32xf32>
    %14 = arith.subf %0, %13 : vector<16x32xf32>
    %15 = arith.mulf %14, %14 : vector<16x32xf32>
    %cst_4 = arith.constant dense<0.000000e+00> : vector<16xf32>
    %16 = vector.multi_reduction <add>, %15, %cst_4 [1] : vector<16x32xf32> to vector<16xf32>
    %17 = vector.shape_cast %16 : vector<16xf32> to vector<16x1xf32>
    %cst_5 = arith.constant 3.200000e+01 : f32
    %18 = vector.broadcast %cst_5 : f32 to vector<16x1xf32>
    %19 = arith.divf %17, %18 : vector<16x1xf32>
    %20 = vector.broadcast %12 : vector<16x1xf32> to vector<16x32xf32>
    %21 = arith.subf %0, %20 : vector<16x32xf32>
    %cst_6 = arith.constant 9.99999997E-7 : f32
    %22 = vector.broadcast %cst_6 : f32 to vector<16x1xf32>
    %23 = arith.addf %19, %22 : vector<16x1xf32>
    %24 = math.rsqrt %23 : vector<16x1xf32>
    %25 = vector.broadcast %24 : vector<16x1xf32> to vector<16x32xf32>
    %26 = arith.mulf %21, %25 : vector<16x32xf32>
    %27 = vector.broadcast %2 : vector<1x32xf32> to vector<16x32xf32>
    %28 = arith.mulf %26, %27 : vector<16x32xf32>
    %29 = vector.broadcast %3 : vector<1x32xf32> to vector<16x32xf32>
    %30 = arith.addf %28, %29 : vector<16x32xf32>
    %c0_7 = arith.constant 0 : index
    %c0_8 = arith.constant 0 : index
    %31 = vector.load %arg2[%c0_7, %c0_8] : memref<32x96xf32, #tpu.memory_space<vmem>>, vector<32x96xf32>
    %cst_9 = arith.constant dense<0.000000e+00> : vector<16x96xf32>
    %32 = tpu.matmul %30, %31, %cst_9 {dimension_numbers = #tpu.dot_dimension_numbers<[1], [0], [0], [1], [0, 0, 1, 1], [], []>} : vector<16x32xf32>, vector<32x96xf32>, vector<16x96xf32> -> vector<16x96xf32>
    %33 = vector.extract_strided_slice %32 {offsets = [0, 0], sizes = [16, 8], strides = [1, 1]} : vector<16x96xf32> to vector<16x8xf32>
    %34 = vector.shape_cast %33 : vector<16x8xf32> to vector<1x2x8x8xf32>
    %35 = vector.extract_strided_slice %32 {offsets = [0, 8], sizes = [16, 8], strides = [1, 1]} : vector<16x96xf32> to vector<16x8xf32>
    %36 = vector.shape_cast %35 : vector<16x8xf32> to vector<1x2x8x8xf32>
    %37 = vector.extract_strided_slice %32 {offsets = [0, 16], sizes = [16, 8], strides = [1, 1]} : vector<16x96xf32> to vector<16x8xf32>
    %38 = vector.shape_cast %37 : vector<16x8xf32> to vector<1x2x8x8xf32>
    %39 = vector.extract_strided_slice %32 {offsets = [0, 24], sizes = [16, 8], strides = [1, 1]} : vector<16x96xf32> to vector<16x8xf32>
    %40 = vector.shape_cast %39 : vector<16x8xf32> to vector<1x2x8x8xf32>
    %41 = tpu.concatenate %34, %36, %38, %40 in 0 : vector<1x2x8x8xf32>, vector<1x2x8x8xf32>, vector<1x2x8x8xf32>, vector<1x2x8x8xf32> -> vector<4x2x8x8xf32>
    %42 = vector.shape_cast %41 : vector<4x2x8x8xf32> to vector<8x8x8xf32>
    %43 = vector.extract_strided_slice %32 {offsets = [0, 32], sizes = [16, 8], strides = [1, 1]} : vector<16x96xf32> to vector<16x8xf32>
    %44 = vector.shape_cast %43 : vector<16x8xf32> to vector<1x2x8x8xf32>
    %45 = vector.extract_strided_slice %32 {offsets = [0, 40], sizes = [16, 8], strides = [1, 1]} : vector<16x96xf32> to vector<16x8xf32>
    %46 = vector.shape_cast %45 : vector<16x8xf32> to vector<1x2x8x8xf32>
    %47 = vector.extract_strided_slice %32 {offsets = [0, 48], sizes = [16, 8], strides = [1, 1]} : vector<16x96xf32> to vector<16x8xf32>
    %48 = vector.shape_cast %47 : vector<16x8xf32> to vector<1x2x8x8xf32>
    %49 = vector.extract_strided_slice %32 {offsets = [0, 56], sizes = [16, 8], strides = [1, 1]} : vector<16x96xf32> to vector<16x8xf32>
    %50 = vector.shape_cast %49 : vector<16x8xf32> to vector<1x2x8x8xf32>
    %51 = tpu.concatenate %44, %46, %48, %50 in 0 : vector<1x2x8x8xf32>, vector<1x2x8x8xf32>, vector<1x2x8x8xf32>, vector<1x2x8x8xf32> -> vector<4x2x8x8xf32>
    %52 = vector.shape_cast %51 : vector<4x2x8x8xf32> to vector<8x8x8xf32>
    %53 = vector.extract_strided_slice %32 {offsets = [0, 64], sizes = [16, 8], strides = [1, 1]} : vector<16x96xf32> to vector<16x8xf32>
    %54 = vector.shape_cast %53 : vector<16x8xf32> to vector<1x2x8x8xf32>
    %55 = vector.extract_strided_slice %32 {offsets = [0, 72], sizes = [16, 8], strides = [1, 1]} : vector<16x96xf32> to vector<16x8xf32>
    %56 = vector.shape_cast %55 : vector<16x8xf32> to vector<1x2x8x8xf32>
    %57 = vector.extract_strided_slice %32 {offsets = [0, 80], sizes = [16, 8], strides = [1, 1]} : vector<16x96xf32> to vector<16x8xf32>
    %58 = vector.shape_cast %57 : vector<16x8xf32> to vector<1x2x8x8xf32>
    %59 = vector.extract_strided_slice %32 {offsets = [0, 88], sizes = [16, 8], strides = [1, 1]} : vector<16x96xf32> to vector<16x8xf32>
    %60 = vector.shape_cast %59 : vector<16x8xf32> to vector<1x2x8x8xf32>
    %61 = tpu.concatenate %54, %56, %58, %60 in 0 : vector<1x2x8x8xf32>, vector<1x2x8x8xf32>, vector<1x2x8x8xf32>, vector<1x2x8x8xf32> -> vector<4x2x8x8xf32>
    %62 = vector.shape_cast %61 : vector<4x2x8x8xf32> to vector<8x8x8xf32>
    "tpu.trace_start"() <{level = 10 : i32, message = "znd,zmd->znm"}> : () -> ()
    %cst_10 = arith.constant dense<0.000000e+00> : vector<8x8x8xf32>
    %63 = tpu.matmul %42, %52, %cst_10 {dimension_numbers = #tpu.dot_dimension_numbers<[2], [2], [1], [1], [0, 0, 0, 1, 1, 1], [0], [0]>} : vector<8x8x8xf32>, vector<8x8x8xf32>, vector<8x8x8xf32> -> vector<8x8x8xf32>
    "tpu.trace_stop"() : () -> ()
    %cst_11 = arith.constant 0.353553385 : f32
    %64 = vector.broadcast %cst_11 : f32 to vector<8x8x8xf32>
    %65 = arith.mulf %63, %64 : vector<8x8x8xf32>
    %cst_12 = arith.constant dense<0xFF800000> : vector<8x8xf32>
    %66 = vector.multi_reduction <maximumf>, %65, %cst_12 [2] : vector<8x8x8xf32> to vector<8x8xf32>
    %67 = vector.shape_cast %66 : vector<8x8xf32> to vector<8x8x1xf32>
    %68 = vector.broadcast %67 : vector<8x8x1xf32> to vector<8x8x8xf32>
    %69 = arith.subf %65, %68 : vector<8x8x8xf32>
    %70 = math.exp %69 : vector<8x8x8xf32>
    %cst_13 = arith.constant dense<0.000000e+00> : vector<8x8xf32>
    %71 = vector.multi_reduction <add>, %70, %cst_13 [2] : vector<8x8x8xf32> to vector<8x8xf32>
    %72 = vector.shape_cast %71 : vector<8x8xf32> to vector<8x8x1xf32>
    %73 = tpu.reciprocal %72 {approx = true} : vector<8x8x1xf32> -> vector<8x8x1xf32>
    %74 = arith.mulf %72, %73 : vector<8x8x1xf32>
    %cst_14 = arith.constant 2.000000e+00 : f32
    %75 = vector.broadcast %cst_14 : f32 to vector<8x8x1xf32>
    %76 = arith.subf %75, %74 : vector<8x8x1xf32>
    %77 = arith.mulf %73, %76 : vector<8x8x1xf32>
    %78 = vector.broadcast %77 : vector<8x8x1xf32> to vector<8x8x8xf32>
    %79 = arith.mulf %70, %78 : vector<8x8x8xf32>
    %80 = vector.extract_strided_slice %79 {offsets = [0, 0, 0], sizes = [1, 8, 8], strides = [1, 1, 1]} : vector<8x8x8xf32> to vector<1x8x8xf32>
    %81 = vector.shape_cast %80 : vector<1x8x8xf32> to vector<8x8xf32>
    %82 = vector.extract_strided_slice %79 {offsets = [1, 0, 0], sizes = [1, 8, 8], strides = [1, 1, 1]} : vector<8x8x8xf32> to vector<1x8x8xf32>
    %83 = vector.shape_cast %82 : vector<1x8x8xf32> to vector<8x8xf32>
    %84 = vector.extract_strided_slice %79 {offsets = [2, 0, 0], sizes = [1, 8, 8], strides = [1, 1, 1]} : vector<8x8x8xf32> to vector<1x8x8xf32>
    %85 = vector.shape_cast %84 : vector<1x8x8xf32> to vector<8x8xf32>
    %86 = vector.extract_strided_slice %79 {offsets = [3, 0, 0], sizes = [1, 8, 8], strides = [1, 1, 1]} : vector<8x8x8xf32> to vector<1x8x8xf32>
    %87 = vector.shape_cast %86 : vector<1x8x8xf32> to vector<8x8xf32>
    %88 = vector.extract_strided_slice %79 {offsets = [4, 0, 0], sizes = [1, 8, 8], strides = [1, 1, 1]} : vector<8x8x8xf32> to vector<1x8x8xf32>
    %89 = vector.shape_cast %88 : vector<1x8x8xf32> to vector<8x8xf32>
    %90 = vector.extract_strided_slice %79 {offsets = [5, 0, 0], sizes = [1, 8, 8], strides = [1, 1, 1]} : vector<8x8x8xf32> to vector<1x8x8xf32>
    %91 = vector.shape_cast %90 : vector<1x8x8xf32> to vector<8x8xf32>
    %92 = vector.extract_strided_slice %79 {offsets = [6, 0, 0], sizes = [1, 8, 8], strides = [1, 1, 1]} : vector<8x8x8xf32> to vector<1x8x8xf32>
    %93 = vector.shape_cast %92 : vector<1x8x8xf32> to vector<8x8xf32>
    %94 = vector.extract_strided_slice %79 {offsets = [7, 0, 0], sizes = [1, 8, 8], strides = [1, 1, 1]} : vector<8x8x8xf32> to vector<1x8x8xf32>
    %95 = vector.shape_cast %94 : vector<1x8x8xf32> to vector<8x8xf32>
    %96 = tpu.concatenate %81, %83, %85, %87, %89, %91, %93, %95 in 1 : vector<8x8xf32>, vector<8x8xf32>, vector<8x8xf32>, vector<8x8xf32>, vector<8x8xf32>, vector<8x8xf32>, vector<8x8xf32>, vector<8x8xf32> -> vector<8x64xf32>
    %97 = vector.extract_strided_slice %96 {offsets = [0, 0], sizes = [4, 64], strides = [1, 1]} : vector<8x64xf32> to vector<4x64xf32>
    %98 = vector.extract_strided_slice %96 {offsets = [4, 0], sizes = [4, 64], strides = [1, 1]} : vector<8x64xf32> to vector<4x64xf32>
    %99 = tpu.concatenate %97, %98 in 1 : vector<4x64xf32>, vector<4x64xf32> -> vector<4x128xf32>
    %c0_15 = arith.constant 0 : index
    %c0_16 = arith.constant 0 : index
    %100 = vector.load %arg7[%c0_15, %c0_16] : memref<4x128xf32, #tpu.memory_space<vmem>>, vector<4x128xf32>
    tpu.vector_store %arg7[%c0_15, %c0_16], %99 {strides = array<i32>} : memref<4x128xf32, #tpu.memory_space<vmem>>, vector<4x128xf32>,
    "tpu.trace_start"() <{level = 10 : i32, message = "znm,zmd->znd"}> : () -> ()
    %cst_17 = arith.constant dense<0.000000e+00> : vector<8x8x8xf32>
    %101 = tpu.matmul %79, %62, %cst_17 {dimension_numbers = #tpu.dot_dimension_numbers<[2], [1], [1], [2], [0, 0, 0, 1, 1, 2], [0], [0]>} : vector<8x8x8xf32>, vector<8x8x8xf32>, vector<8x8x8xf32> -> vector<8x8x8xf32>
    "tpu.trace_stop"() : () -> ()
    %102 = vector.shape_cast %101 : vector<8x8x8xf32> to vector<4x2x8x8xf32>
    %103 = vector.extract_strided_slice %102 {offsets = [0, 0, 0, 0], sizes = [1, 2, 8, 8], strides = [1, 1, 1, 1]} : vector<4x2x8x8xf32> to vector<1x2x8x8xf32>
    %104 = vector.shape_cast %103 : vector<1x2x8x8xf32> to vector<2x8x8xf32>
    %105 = vector.shape_cast %104 : vector<2x8x8xf32> to vector<16x8xf32>
    %106 = vector.extract_strided_slice %102 {offsets = [1, 0, 0, 0], sizes = [1, 2, 8, 8], strides = [1, 1, 1, 1]} : vector<4x2x8x8xf32> to vector<1x2x8x8xf32>
    %107 = vector.shape_cast %106 : vector<1x2x8x8xf32> to vector<2x8x8xf32>
    %108 = vector.shape_cast %107 : vector<2x8x8xf32> to vector<16x8xf32>
    %109 = vector.extract_strided_slice %102 {offsets = [2, 0, 0, 0], sizes = [1, 2, 8, 8], strides = [1, 1, 1, 1]} : vector<4x2x8x8xf32> to vector<1x2x8x8xf32>
    %110 = vector.shape_cast %109 : vector<1x2x8x8xf32> to vector<2x8x8xf32>
    %111 = vector.shape_cast %110 : vector<2x8x8xf32> to vector<16x8xf32>
    %112 = vector.extract_strided_slice %102 {offsets = [3, 0, 0, 0], sizes = [1, 2, 8, 8], strides = [1, 1, 1, 1]} : vector<4x2x8x8xf32> to vector<1x2x8x8xf32>
    %113 = vector.shape_cast %112 : vector<1x2x8x8xf32> to vector<2x8x8xf32>
    %114 = vector.shape_cast %113 : vector<2x8x8xf32> to vector<16x8xf32>
    %115 = tpu.concatenate %105, %108, %111, %114 in 1 : vector<16x8xf32>, vector<16x8xf32>, vector<16x8xf32>, vector<16x8xf32> -> vector<16x32xf32>
    %c0_18 = arith.constant 0 : index
    %c0_19 = arith.constant 0 : index
    %116 = vector.load %arg3[%c0_18, %c0_19] : memref<32x32xf32, #tpu.memory_space<vmem>>, vector<32x32xf32>
    %cst_20 = arith.constant dense<0.000000e+00> : vector<16x32xf32>
    %117 = tpu.matmul %115, %116, %cst_20 {dimension_numbers = #tpu.dot_dimension_numbers<[1], [0], [0], [1], [0, 0, 1, 1], [], []>} : vector<16x32xf32>, vector<32x32xf32>, vector<16x32xf32> -> vector<16x32xf32>
    %118 = vector.broadcast %4 : vector<1x32xf32> to vector<16x32xf32>
    %119 = arith.addf %117, %118 : vector<16x32xf32>
    %120 = arith.addf %0, %119 : vector<16x32xf32>
    %cst_21 = arith.constant dense<0.000000e+00> : vector<16xf32>
    %121 = vector.multi_reduction <add>, %120, %cst_21 [1] : vector<16x32xf32> to vector<16xf32>
    %122 = vector.shape_cast %121 : vector<16xf32> to vector<16x1xf32>
    %cst_22 = arith.constant 3.200000e+01 : f32
    %123 = vector.broadcast %cst_22 : f32 to vector<16x1xf32>
    %124 = arith.divf %122, %123 : vector<16x1xf32>
    %125 = vector.broadcast %124 : vector<16x1xf32> to vector<16x32xf32>
    %126 = arith.subf %120, %125 : vector<16x32xf32>
    %127 = arith.mulf %126, %126 : vector<16x32xf32>
    %cst_23 = arith.constant dense<0.000000e+00> : vector<16xf32>
    %128 = vector.multi_reduction <add>, %127, %cst_23 [1] : vector<16x32xf32> to vector<16xf32>
    %129 = vector.shape_cast %128 : vector<16xf32> to vector<16x1xf32>
    %cst_24 = arith.constant 3.200000e+01 : f32
    %130 = vector.broadcast %cst_24 : f32 to vector<16x1xf32>
    %131 = arith.divf %129, %130 : vector<16x1xf32>
    %132 = vector.broadcast %124 : vector<16x1xf32> to vector<16x32xf32>
    %133 = arith.subf %120, %132 : vector<16x32xf32>
    %cst_25 = arith.constant 9.99999997E-7 : f32
    %134 = vector.broadcast %cst_25 : f32 to vector<16x1xf32>
    %135 = arith.addf %131, %134 : vector<16x1xf32>
    %136 = math.rsqrt %135 : vector<16x1xf32>
    %137 = vector.broadcast %136 : vector<16x1xf32> to vector<16x32xf32>
    %138 = arith.mulf %133, %137 : vector<16x32xf32>
    %139 = vector.broadcast %5 : vector<1x32xf32> to vector<16x32xf32>
    %140 = arith.mulf %138, %139 : vector<16x32xf32>
    %141 = vector.broadcast %6 : vector<1x32xf32> to vector<16x32xf32>
    %142 = arith.addf %140, %141 : vector<16x32xf32>
    %c0_26 = arith.constant 0 : index
    %c0_27 = arith.constant 0 : index
    %143 = vector.load %arg4[%c0_26, %c0_27] : memref<32x128xf32, #tpu.memory_space<vmem>>, vector<32x128xf32>
    %cst_28 = arith.constant dense<0.000000e+00> : vector<16x128xf32>
    %144 = tpu.matmul %142, %143, %cst_28 {dimension_numbers = #tpu.dot_dimension_numbers<[1], [0], [0], [1], [0, 0, 1, 1], [], []>} : vector<16x32xf32>, vector<32x128xf32>, vector<16x128xf32> -> vector<16x128xf32>
    %145 = vector.broadcast %8 : vector<1x128xf32> to vector<16x128xf32>
    %146 = arith.addf %144, %145 : vector<16x128xf32>
    %cst_29 = arith.constant 5.000000e-01 : f32
    %147 = vector.broadcast %cst_29 : f32 to vector<16x128xf32>
    %148 = arith.mulf %147, %146 : vector<16x128xf32>
    %cst_30 = arith.constant 0.707106769 : f32
    %149 = vector.broadcast %cst_30 : f32 to vector<16x128xf32>
    %150 = arith.mulf %146, %149 : vector<16x128xf32>
    %151 = math.erf %150 : vector<16x128xf32>
    %cst_31 = arith.constant 1.000000e+00 : f32
    %152 = vector.broadcast %cst_31 : f32 to vector<16x128xf32>
    %153 = arith.addf %152, %151 : vector<16x128xf32>
    %154 = arith.mulf %148, %153 : vector<16x128xf32>
    %c0_32 = arith.constant 0 : index
    %c0_33 = arith.constant 0 : index
    %155 = vector.load %arg5[%c0_32, %c0_33] : memref<128x32xf32, #tpu.memory_space<vmem>>, vector<128x32xf32>
    %cst_34 = arith.constant dense<0.000000e+00> : vector<16x32xf32>
    %156 = tpu.matmul %154, %155, %cst_34 {dimension_numbers = #tpu.dot_dimension_numbers<[1], [0], [0], [1], [0, 0, 1, 1], [], []>} : vector<16x128xf32>, vector<128x32xf32>, vector<16x32xf32> -> vector<16x32xf32>
    %157 = vector.broadcast %7 : vector<1x32xf32> to vector<16x32xf32>
    %158 = arith.addf %156, %157 : vector<16x32xf32>
    %159 = arith.addf %120, %158 : vector<16x32xf32>
    %160 = vector.extract_strided_slice %159 {offsets = [0, 0], sizes = [4, 32], strides = [1, 1]} : vector<16x32xf32> to vector<4x32xf32>
    %161 = vector.extract_strided_slice %159 {offsets = [4, 0], sizes = [4, 32], strides = [1, 1]} : vector<16x32xf32> to vector<4x32xf32>
    %162 = vector.extract_strided_slice %159 {offsets = [8, 0], sizes = [4, 32], strides = [1, 1]} : vector<16x32xf32> to vector<4x32xf32>
    %163 = vector.extract_strided_slice %159 {offsets = [12, 0], sizes = [4, 32], strides = [1, 1]} : vector<16x32xf32> to vector<4x32xf32>
    %164 = tpu.concatenate %160, %161, %162, %163 in 1 : vector<4x32xf32>, vector<4x32xf32>, vector<4x32xf32>, vector<4x32xf32> -> vector<4x128xf32>
    %c0_35 = arith.constant 0 : index
    %c0_36 = arith.constant 0 : index
    %165 = vector.load %arg6[%c0_35, %c0_36] : memref<4x128xf32, #tpu.memory_space<vmem>>, vector<4x128xf32>
    tpu.vector_store %arg6[%c0_35, %c0_36], %164 {strides = array<i32>} : memref<4x128xf32, #tpu.memory_space<vmem>>, vector<4x128xf32>,
    return
  }
}

</mosaic_0001>

<llo_original>
// kernel: block_forward.1
$region0: #{block_forward.1}
  #allocation0 [shape = 'u32[]', space=smem, size = 0x4, offset = 0x4, fixed_abs, tag = 'smem constant byte address 0x4 - core index']
  #allocation1 [shape = 'u32[144,128]{1,0:T(1,128)}', space=vmem, size = 0x12000, scoped, tag = 'internal scratch']
  %s0 = inlined_call_operand.vmem [shape: f32[16,32], index: 0, kind: input, shape index: {}]
  %s1 = inlined_call_operand.vmem [shape: f32[8,128], index: 1, kind: input, shape index: {}]
  %s2 = inlined_call_operand.vmem [shape: f32[32,96], index: 2, kind: input, shape index: {}]
  %s3 = inlined_call_operand.vmem [shape: f32[32,32], index: 3, kind: input, shape index: {}]
  %s4 = inlined_call_operand.vmem [shape: f32[32,128], index: 4, kind: input, shape index: {}]
  %s5 = inlined_call_operand.vmem [shape: f32[128,32], index: 5, kind: input, shape index: {}]
  %s6 = inlined_call_operand.vmem [shape: f32[4,128], index: 6, kind: output, shape index: {0}]
  %s7 = inlined_call_operand.vmem [shape: f32[4,128], index: 7, kind: output, shape index: {1}]
  %8 = xla_tuple %s6, %s7
  %s9 = sld [smem:[#allocation0]]
  $region42: #{block_forward.1} parent=0
    _
  %s11 = ssub.s32 1, %s9
  %s12 = scalar_select 0, %s11, %s9
  // Predicated region
  $region2: #{block_forward.1} parent=0 // pred_check
    _
  $region3: #{block_forward.1} parent=0 // pred_check_branch
    %14 = sbr.rel (0) target = $region5
  $region4: #{block_forward.1} parent=0 // pred_region
    _
  $region5: #{block_forward.1} parent=0 // pred_fallthru
    _
  // Predicated region
  $region6: #{block_forward.1} parent=0 // pred_check
    _
  $region7: #{block_forward.1} parent=0 // pred_check_branch
    %16 = sbr.rel (0) target = $region9
  $region8: #{block_forward.1} parent=0 // pred_region
    _
  $region9: #{block_forward.1} parent=0 // pred_fallthru
    _
  // Predicated region
  $region10: #{block_forward.1} parent=0 // pred_check
    _
  $region11: #{block_forward.1} parent=0 // pred_check_branch
    %18 = sbr.rel (0) target = $region13
  $region12: #{block_forward.1} parent=0 // pred_region
    _
  $region13: #{block_forward.1} parent=0 // pred_fallthru
    _
  // Predicated region
  $region14: #{block_forward.1} parent=0 // pred_check
    _
  $region15: #{block_forward.1} parent=0 // pred_check_branch
    %20 = sbr.rel (0) target = $region17
  $region16: #{block_forward.1} parent=0 // pred_region
    _
  $region17: #{block_forward.1} parent=0 // pred_fallthru
    _
  // Predicated region
  $region18: #{block_forward.1} parent=0 // pred_check
    _
  $region19: #{block_forward.1} parent=0 // pred_check_branch
    %22 = sbr.rel (0) target = $region21
  $region20: #{block_forward.1} parent=0 // pred_region
    _
  $region21: #{block_forward.1} parent=0 // pred_fallthru
    _
  // Predicated region
  $region22: #{block_forward.1} parent=0 // pred_check
    _
  $region23: #{block_forward.1} parent=0 // pred_check_branch
    %24 = sbr.rel (0) target = $region25
  $region24: #{block_forward.1} parent=0 // pred_region
    _
  $region25: #{block_forward.1} parent=0 // pred_fallthru
    _
  %v25 = vld [vmem:[%s0] sm:$0xff]
  %v26 = vld [vmem:[%s0 + $0x8] sm:$0xff]
  %v27 = vld [vmem:[%s1] sm:$0xff]
  %vm28 = vcmask 261120
  %v29 = vsel %vm28, %v25, 0.0
  %30 = vadd.xlane.f32.xlu0 %v29
  %v31 = vpop.xlane.xlu0 %30
  %v32 = vsel %vm28, %v26, 0.0
  %33 = vadd.xlane.f32.xlu0 %v32
  %v34 = vpop.xlane.xlu0 %33
  %v35 = vrcp.pop 32.0
  %v36 = vmul.f32 %v31, %v35
  %v37 = vmul.f32 %v34, %v35
  %v38 = vsub.f32 %v25, %v36
  %v39 = vsub.f32 %v26, %v37
  %v40 = vmul.f32 %v38, %v38
  %v41 = vmul.f32 %v39, %v39
  %v42 = vsel %vm28, %v40, 0.0
  %43 = vadd.xlane.f32.xlu0 %v42
  %v44 = vpop.xlane.xlu0 %43
  %v45 = vsel %vm28, %v41, 0.0
  %46 = vadd.xlane.f32.xlu0 %v45
  %v47 = vpop.xlane.xlu0 %46
  %v48 = vmul.f32 %v44, %v35
  %v49 = vmul.f32 %v47, %v35
  %v50 = vadd.f32 %v48, 1e-06
  %v51 = vadd.f32 %v49, 1e-06
  %v52 = vrsqrt.pop %v50
  %v53 = vrsqrt.pop %v51
  %v54 = vmul.f32 %v38, %v52
  %v55 = vmul.f32 %v39, %v53
  %v56 = vlaneseq
  %v57 = vshrl.u32 %v56, 7
  %v58 = vsub.s32 0, %v57
  %v59 = vrot.slane %v27, %v58
  %v60 = vmul.f32 %v54, %v59
  %v61 = vmul.f32 %v55, %v59
  %v62 = vlaneseq
  %v63 = vshrl.u32 %v62, 7
  %v64 = vsub.s32 1, %v63
  %v65 = vrot.slane %v27, %v64
  %v66 = vadd.f32 %v60, %v65
  %v67 = vadd.f32 %v61, %v65
  %v68 = vld [vmem:[%s2] sm:$0xff]
  %v69 = vld [vmem:[%s2 + $0x8] sm:$0xff]
  %v70 = vld [vmem:[%s2 + $0x10] sm:$0xff]
  %v71 = vld [vmem:[%s2 + $0x18] sm:$0xff]
  %v73 = vsel %vm28, %v66, 0
  %v76 = vsel %vm28, %v67, 0
  %78 = vmatprep.subr.mxu0 0.0
  %79 = vmatpush1.msra.mxu0 %v68
  %80 = vmatprep.subr.mxu0 0.0
  %81 = vmatpush1.msra.mxu0 %v69
  %82 = vmatprep.subr.mxu0 0.0
  %83 = vmatpush1.msra.mxu0 %v70
  %84 = vmatprep.subr.mxu0 0.0
  %85 = vmatpush1.msra.mxu0 %v71
  %86 = vmatprep.subr.mxu0 0.0
  %87 = vmatpush1.msra.mxu0 0.0
  %88 = vmatprep.subr.mxu0 0.0
  %89 = vmatpush1.msra.mxu0 0.0
  %90 = vmatprep.subr.mxu0 0.0
  %91 = vmatpush1.msra.mxu0 0.0
  %92 = vmatprep.subr.mxu0 0.0
  %93 = vmatpush1.msra.mxu0 0.0
  %94 = vmatprep.subr.mxu0 0.0
  %95 = vmatpush1.msra.mxu0 0.0
  %96 = vmatprep.subr.mxu0 0.0
  %97 = vmatpush1.msra.mxu0 0.0
  %98 = vmatprep.subr.mxu0 0.0
  %99 = vmatpush1.msra.mxu0 0.0
  %100 = vmatprep.subr.mxu0 0.0
  %101 = vmatpush1.msra.mxu0 0.0
  %102 = vmatprep.subr.mxu0 0.0
  %103 = vmatpush1.msra.mxu0 0.0
  %104 = vmatprep.subr.mxu0 0.0
  %105 = vmatpush1.msra.mxu0 0.0
  %106 = vmatprep.subr.mxu0 0.0
  %107 = vmatpush1.msra.mxu0 0.0
  %108 = vmatprep.subr.mxu0 0.0
  %109 = vmatpush1.msra.mxu0 0.0
  %110 = vmatprep.subr.mxu0 0.0
  %111 = vmatpush1.msra.mxu0 0.0
  %112 = vmatprep.subr.mxu0 0.0
  %113 = vmatpush1.msra.mxu0 0.0
  %114 = vmatprep.subr.mxu0 0.0
  %115 = vmatpush1.msra.mxu0 0.0
  %116 = vmatprep.subr.mxu0 0.0
  %117 = vmatpush1.msra.mxu0 0.0
  %118 = vmatprep.subr.mxu0 0.0
  %119 = vmatpush1.msra.mxu0 0.0
  %120 = vmatprep.subr.mxu0 0.0
  %121 = vmatpush1.msra.mxu0 0.0
  %122 = vmatprep.subr.mxu0 0.0
  %123 = vmatpush1.msra.mxu0 0.0
  %124 = vmatprep.subr.mxu0 0.0
  %125 = vmatpush1.msra.mxu0 0.0
  %126 = vmatprep.subr.mxu0 0.0
  %127 = vmatpush1.msra.mxu0 0.0
  %128 = vmatprep.subr.mxu0 0.0
  %129 = vmatpush1.msra.mxu0 0.0
  %130 = vmatprep.subr.mxu0 0.0
  %131 = vmatpush1.msra.mxu0 0.0
  %132 = vmatprep.subr.mxu0 0.0
  %133 = vmatpush1.msra.mxu0 0.0
  %134 = vmatprep.subr.mxu0 0.0
  %135 = vmatpush1.msra.mxu0 0.0
  %136 = vmatprep.subr.mxu0 0.0
  %137 = vmatpush1.msra.mxu0 0.0
  %138 = vmatprep.subr.mxu0 0.0
  %139 = vmatpush1.msra.mxu0 0.0
  %140 = vmatprep.subr.mxu0 0.0
  %141 = vmatpush1.msra.mxu0 0.0
  %142 = vmatprep.mubr.f32.mxu0 0.0
  %143 = vmatmul.mubr.f32.gmra.mrb[0].mxu0 %v73
  %v144 = vpop.f32.mrb[0].mxu0
  %v145 = vadd.f32 0.0, %v144
  %v146 = vpop.f32.mrb[0].mxu0
  %147 = vmatprep.mubr.f32.mxu0 0.0
  %148 = vmatmul.mubr.f32.gmra.mrb[0].mxu0 %v76
  %v149 = vpop.f32.mrb[0].mxu0
  %v150 = vadd.f32 0.0, %v149
  %v151 = vpop.f32.mrb[0].mxu0
  %152 = vdwg.mxu0
  %155 = vrot.lane.b32.xlu0 %v145, 120
  %v156 = vpop.permute.xlu0 %155
  %157 = vrot.lane.b32.xlu0 %v150, 120
  %v158 = vpop.permute.xlu0 %157
  %159 = vrot.lane.b32.xlu0 %v145, 112
  %v160 = vpop.permute.xlu0 %159
  %161 = vrot.lane.b32.xlu0 %v150, 112
  %v162 = vpop.permute.xlu0 %161
  %163 = vrot.lane.b32.xlu0 %v145, 104
  %v164 = vpop.permute.xlu0 %163
  %165 = vrot.lane.b32.xlu0 %v150, 104
  %v166 = vpop.permute.xlu0 %165
  %167 = vrot.lane.b32.xlu0 %v145, 96
  %v168 = vpop.permute.xlu0 %167
  %vm169 = vcmask 64512
  %v170 = vsel %vm169, %v145, 0
  %v172 = vsel %vm169, %v168, 0
  %174 = vmatprep.subr.mxu0 0.0
  %175 = vmatpush1.xpose.msra.mxu0 %v172
  %176 = vmatprep.subr.mxu0 0.0
  %177 = vmatpush1.xpose.msra.mxu0 0.0
  %178 = vmatprep.subr.mxu0 0.0
  %179 = vmatpush1.xpose.msra.mxu0 0.0
  %180 = vmatprep.subr.mxu0 0.0
  %181 = vmatpush1.xpose.msra.mxu0 0.0
  %182 = vmatprep.subr.mxu0 0.0
  %183 = vmatpush1.xpose.msra.mxu0 0.0
  %184 = vmatprep.subr.mxu0 0.0
  %185 = vmatpush1.xpose.msra.mxu0 0.0
  %186 = vmatprep.subr.mxu0 0.0
  %187 = vmatpush1.xpose.msra.mxu0 0.0
  %188 = vmatprep.subr.mxu0 0.0
  %189 = vmatpush1.xpose.msra.mxu0 0.0
  %190 = vmatprep.subr.mxu0 0.0
  %191 = vmatpush1.xpose.msra.mxu0 0.0
  %192 = vmatprep.subr.mxu0 0.0
  %193 = vmatpush1.xpose.msra.mxu0 0.0
  %194 = vmatprep.subr.mxu0 0.0
  %195 = vmatpush1.xpose.msra.mxu0 0.0
  %196 = vmatprep.subr.mxu0 0.0
  %197 = vmatpush1.xpose.msra.mxu0 0.0
  %198 = vmatprep.subr.mxu0 0.0
  %199 = vmatpush1.xpose.msra.mxu0 0.0
  %200 = vmatprep.subr.mxu0 0.0
  %201 = vmatpush1.xpose.msra.mxu0 0.0
  %202 = vmatprep.subr.mxu0 0.0
  %203 = vmatpush1.xpose.msra.mxu0 0.0
  %204 = vmatprep.subr.mxu0 0.0
  %205 = vmatpush1.xpose.msra.mxu0 0.0
  %206 = vmatprep.subr.mxu0 0.0
  %207 = vmatpush1.xpose.msra.mxu0 0.0
  %208 = vmatprep.subr.mxu0 0.0
  %209 = vmatpush1.xpose.msra.mxu0 0.0
  %210 = vmatprep.subr.mxu0 0.0
  %211 = vmatpush1.xpose.msra.mxu0 0.0
  %212 = vmatprep.subr.mxu0 0.0
  %213 = vmatpush1.xpose.msra.mxu0 0.0
  %214 = vmatprep.subr.mxu0 0.0
  %215 = vmatpush1.xpose.msra.mxu0 0.0
  %216 = vmatprep.subr.mxu0 0.0
  %217 = vmatpush1.xpose.msra.mxu0 0.0
  %218 = vmatprep.subr.mxu0 0.0
  %219 = vmatpush1.xpose.msra.mxu0 0.0
  %220 = vmatprep.subr.mxu0 0.0
  %221 = vmatpush1.xpose.msra.mxu0 0.0
  %222 = vmatprep.subr.mxu0 0.0
  %223 = vmatpush1.xpose.msra.mxu0 0.0
  %224 = vmatprep.subr.mxu0 0.0
  %225 = vmatpush1.xpose.msra.mxu0 0.0
  %226 = vmatprep.subr.mxu0 0.0
  %227 = vmatpush1.xpose.msra.mxu0 0.0
  %228 = vmatprep.subr.mxu0 0.0
  %229 = vmatpush1.xpose.msra.mxu0 0.0
  %230 = vmatprep.subr.mxu0 0.0
  %231 = vmatpush1.xpose.msra.mxu0 0.0
  %232 = vmatprep.subr.mxu0 0.0
  %233 = vmatpush1.xpose.msra.mxu0 0.0
  %234 = vmatprep.subr.mxu0 0.0
  %235 = vmatpush1.xpose.msra.mxu0 0.0
  %236 = vmatprep.subr.mxu0 0.0
  %237 = vmatpush1.xpose.msra.mxu0 0.0
  %238 = vmatprep.mubr.f32.mxu0 0.0
  %239 = vmatmul.mubr.f32.gmra.mrb[0].mxu0 %v170
  %v240 = vpop.f32.mrb[0].mxu0
  %v241 = vadd.f32 0.0, %v240
  %v242 = vpop.f32.mrb[0].mxu0
  %243 = vdwg.mxu0
  %244 = vrot.lane.b32.xlu0 %v150, 96
  %v245 = vpop.permute.xlu0 %244
  %v246 = vsel %vm169, %v150, 0
  %v248 = vsel %vm169, %v245, 0
  %250 = vmatprep.subr.mxu0 0.0
  %251 = vmatpush1.xpose.msra.mxu0 %v248
  %252 = vmatprep.subr.mxu0 0.0
  %253 = vmatpush1.xpose.msra.mxu0 0.0
  %254 = vmatprep.subr.mxu0 0.0
  %255 = vmatpush1.xpose.msra.mxu0 0.0
  %256 = vmatprep.subr.mxu0 0.0
  %257 = vmatpush1.xpose.msra.mxu0 0.0
  %258 = vmatprep.subr.mxu0 0.0
  %259 = vmatpush1.xpose.msra.mxu0 0.0
  %260 = vmatprep.subr.mxu0 0.0
  %261 = vmatpush1.xpose.msra.mxu0 0.0
  %262 = vmatprep.subr.mxu0 0.0
  %263 = vmatpush1.xpose.msra.mxu0 0.0
  %264 = vmatprep.subr.mxu0 0.0
  %265 = vmatpush1.xpose.msra.mxu0 0.0
  %266 = vmatprep.subr.mxu0 0.0
  %267 = vmatpush1.xpose.msra.mxu0 0.0
  %268 = vmatprep.subr.mxu0 0.0
  %269 = vmatpush1.xpose.msra.mxu0 0.0
  %270 = vmatprep.subr.mxu0 0.0
  %271 = vmatpush1.xpose.msra.mxu0 0.0
  %272 = vmatprep.subr.mxu0 0.0
  %273 = vmatpush1.xpose.msra.mxu0 0.0
  %274 = vmatprep.subr.mxu0 0.0
  %275 = vmatpush1.xpose.msra.mxu0 0.0
  %276 = vmatprep.subr.mxu0 0.0
  %277 = vmatpush1.xpose.msra.mxu0 0.0
  %278 = vmatprep.subr.mxu0 0.0
  %279 = vmatpush1.xpose.msra.mxu0 0.0
  %280 = vmatprep.subr.mxu0 0.0
  %281 = vmatpush1.xpose.msra.mxu0 0.0
  %282 = vmatprep.subr.mxu0 0.0
  %283 = vmatpush1.xpose.msra.mxu0 0.0
  %284 = vmatprep.subr.mxu0 0.0
  %285 = vmatpush1.xpose.msra.mxu0 0.0
  %286 = vmatprep.subr.mxu0 0.0
  %287 = vmatpush1.xpose.msra.mxu0 0.0
  %288 = vmatprep.subr.mxu0 0.0
  %289 = vmatpush1.xpose.msra.mxu0 0.0
  %290 = vmatprep.subr.mxu0 0.0
  %291 = vmatpush1.xpose.msra.mxu0 0.0
  %292 = vmatprep.subr.mxu0 0.0
  %293 = vmatpush1.xpose.msra.mxu0 0.0
  %294 = vmatprep.subr.mxu0 0.0
  %295 = vmatpush1.xpose.msra.mxu0 0.0
  %296 = vmatprep.subr.mxu0 0.0
  %297 = vmatpush1.xpose.msra.mxu0 0.0
  %298 = vmatprep.subr.mxu0 0.0
  %299 = vmatpush1.xpose.msra.mxu0 0.0
  %300 = vmatprep.subr.mxu0 0.0
  %301 = vmatpush1.xpose.msra.mxu0 0.0
  %302 = vmatprep.subr.mxu0 0.0
  %303 = vmatpush1.xpose.msra.mxu0 0.0
  %304 = vmatprep.subr.mxu0 0.0
  %305 = vmatpush1.xpose.msra.mxu0 0.0
  %306 = vmatprep.subr.mxu0 0.0
  %307 = vmatpush1.xpose.msra.mxu0 0.0
  %308 = vmatprep.subr.mxu0 0.0
  %309 = vmatpush1.xpose.msra.mxu0 0.0
  %310 = vmatprep.subr.mxu0 0.0
  %311 = vmatpush1.xpose.msra.mxu0 0.0
  %312 = vmatprep.subr.mxu0 0.0
  %313 = vmatpush1.xpose.msra.mxu0 0.0
  %314 = vmatprep.mubr.f32.mxu0 0.0
  %315 = vmatmul.mubr.f32.gmra.mrb[0].mxu0 %v246
  %v316 = vpop.f32.mrb[0].mxu0
  %v317 = vadd.f32 0.0, %v316
  %v318 = vpop.f32.mrb[0].mxu0
  %319 = vdwg.mxu0
  %320 = vrot.lane.b32.xlu0 %v156, 96
  %v321 = vpop.permute.xlu0 %320
  %v322 = vsel %vm169, %v156, 0
  %v324 = vsel %vm169, %v321, 0
  %326 = vmatprep.subr.mxu0 0.0
  %327 = vmatpush1.xpose.msra.mxu0 %v324
  %328 = vmatprep.subr.mxu0 0.0
  %329 = vmatpush1.xpose.msra.mxu0 0.0
  %330 = vmatprep.subr.mxu0 0.0
  %331 = vmatpush1.xpose.msra.mxu0 0.0
  %332 = vmatprep.subr.mxu0 0.0
  %333 = vmatpush1.xpose.msra.mxu0 0.0
  %334 = vmatprep.subr.mxu0 0.0
  %335 = vmatpush1.xpose.msra.mxu0 0.0
  %336 = vmatprep.subr.mxu0 0.0
  %337 = vmatpush1.xpose.msra.mxu0 0.0
  %338 = vmatprep.subr.mxu0 0.0
  %339 = vmatpush1.xpose.msra.mxu0 0.0
  %340 = vmatprep.subr.mxu0 0.0
  %341 = vmatpush1.xpose.msra.mxu0 0.0
  %342 = vmatprep.subr.mxu0 0.0
  %343 = vmatpush1.xpose.msra.mxu0 0.0
  %344 = vmatprep.subr.mxu0 0.0
  %345 = vmatpush1.xpose.msra.mxu0 0.0
  %346 = vmatprep.subr.mxu0 0.0
  %347 = vmatpush1.xpose.msra.mxu0 0.0
  %348 = vmatprep.subr.mxu0 0.0
  %349 = vmatpush1.xpose.msra.mxu0 0.0
  %350 = vmatprep.subr.mxu0 0.0
  %351 = vmatpush1.xpose.msra.mxu0 0.0
  %352 = vmatprep.subr.mxu0 0.0
  %353 = vmatpush1.xpose.msra.mxu0 0.0
  %354 = vmatprep.subr.mxu0 0.0
  %355 = vmatpush1.xpose.msra.mxu0 0.0
  %356 = vmatprep.subr.mxu0 0.0
  %357 = vmatpush1.xpose.msra.mxu0 0.0
  %358 = vmatprep.subr.mxu0 0.0
  %359 = vmatpush1.xpose.msra.mxu0 0.0
  %360 = vmatprep.subr.mxu0 0.0
  %361 = vmatpush1.xpose.msra.mxu0 0.0
  %362 = vmatprep.subr.mxu0 0.0
  %363 = vmatpush1.xpose.msra.mxu0 0.0
  %364 = vmatprep.subr.mxu0 0.0
  %365 = vmatpush1.xpose.msra.mxu0 0.0
  %366 = vmatprep.subr.mxu0 0.0
  %367 = vmatpush1.xpose.msra.mxu0 0.0
  %368 = vmatprep.subr.mxu0 0.0
  %369 = vmatpush1.xpose.msra.mxu0 0.0
  %370 = vmatprep.subr.mxu0 0.0
  %371 = vmatpush1.xpose.msra.mxu0 0.0
  %372 = vmatprep.subr.mxu0 0.0
  %373 = vmatpush1.xpose.msra.mxu0 0.0
  %374 = vmatprep.subr.mxu0 0.0
  %375 = vmatpush1.xpose.msra.mxu0 0.0
  %376 = vmatprep.subr.mxu0 0.0
  %377 = vmatpush1.xpose.msra.mxu0 0.0
  %378 = vmatprep.subr.mxu0 0.0
  %379 = vmatpush1.xpose.msra.mxu0 0.0
  %380 = vmatprep.subr.mxu0 0.0
  %381 = vmatpush1.xpose.msra.mxu0 0.0
  %382 = vmatprep.subr.mxu0 0.0
  %383 = vmatpush1.xpose.msra.mxu0 0.0
  %384 = vmatprep.subr.mxu0 0.0
  %385 = vmatpush1.xpose.msra.mxu0 0.0
  %386 = vmatprep.subr.mxu0 0.0
  %387 = vmatpush1.xpose.msra.mxu0 0.0
  %388 = vmatprep.subr.mxu0 0.0
  %389 = vmatpush1.xpose.msra.mxu0 0.0
  %390 = vmatprep.mubr.f32.mxu0 0.0
  %391 = vmatmul.mubr.f32.gmra.mrb[0].mxu0 %v322
  %v392 = vpop.f32.mrb[0].mxu0
  %v393 = vadd.f32 0.0, %v392
  %v394 = vpop.f32.mrb[0].mxu0
  %395 = vdwg.mxu0
  %396 = vrot.lane.b32.xlu0 %v158, 96
  %v397 = vpop.permute.xlu0 %396
  %v398 = vsel %vm169, %v158, 0
  %v400 = vsel %vm169, %v397, 0
  %402 = vmatprep.subr.mxu0 0.0
  %403 = vmatpush1.xpose.msra.mxu0 %v400
  %404 = vmatprep.subr.mxu0 0.0
  %405 = vmatpush1.xpose.msra.mxu0 0.0
  %406 = vmatprep.subr.mxu0 0.0
  %407 = vmatpush1.xpose.msra.mxu0 0.0
  %408 = vmatprep.subr.mxu0 0.0
  %409 = vmatpush1.xpose.msra.mxu0 0.0
  %410 = vmatprep.subr.mxu0 0.0
  %411 = vmatpush1.xpose.msra.mxu0 0.0
  %412 = vmatprep.subr.mxu0 0.0
  %413 = vmatpush1.xpose.msra.mxu0 0.0
  %414 = vmatprep.subr.mxu0 0.0
  %415 = vmatpush1.xpose.msra.mxu0 0.0
  %416 = vmatprep.subr.mxu0 0.0
  %417 = vmatpush1.xpose.msra.mxu0 0.0
  %418 = vmatprep.subr.mxu0 0.0
  %419 = vmatpush1.xpose.msra.mxu0 0.0
  %420 = vmatprep.subr.mxu0 0.0
  %421 = vmatpush1.xpose.msra.mxu0 0.0
  %422 = vmatprep.subr.mxu0 0.0
  %423 = vmatpush1.xpose.msra.mxu0 0.0
  %424 = vmatprep.subr.mxu0 0.0
  %425 = vmatpush1.xpose.msra.mxu0 0.0
  %426 = vmatprep.subr.mxu0 0.0
  %427 = vmatpush1.xpose.msra.mxu0 0.0
  %428 = vmatprep.subr.mxu0 0.0
  %429 = vmatpush1.xpose.msra.mxu0 0.0
  %430 = vmatprep.subr.mxu0 0.0
  %431 = vmatpush1.xpose.msra.mxu0 0.0
  %432 = vmatprep.subr.mxu0 0.0
  %433 = vmatpush1.xpose.msra.mxu0 0.0
  %434 = vmatprep.subr.mxu0 0.0
  %435 = vmatpush1.xpose.msra.mxu0 0.0
  %436 = vmatprep.subr.mxu0 0.0
  %437 = vmatpush1.xpose.msra.mxu0 0.0
  %438 = vmatprep.subr.mxu0 0.0
  %439 = vmatpush1.xpose.msra.mxu0 0.0
  %440 = vmatprep.subr.mxu0 0.0
  %441 = vmatpush1.xpose.msra.mxu0 0.0
  %442 = vmatprep.subr.mxu0 0.0
  %443 = vmatpush1.xpose.msra.mxu0 0.0
  %444 = vmatprep.subr.mxu0 0.0
  %445 = vmatpush1.xpose.msra.mxu0 0.0
  %446 = vmatprep.subr.mxu0 0.0
  %447 = vmatpush1.xpose.msra.mxu0 0.0
  %448 = vmatprep.subr.mxu0 0.0
  %449 = vmatpush1.xpose.msra.mxu0 0.0
  %450 = vmatprep.subr.mxu0 0.0
  %451 = vmatpush1.xpose.msra.mxu0 0.0
  %452 = vmatprep.subr.mxu0 0.0
  %453 = vmatpush1.xpose.msra.mxu0 0.0
  %454 = vmatprep.subr.mxu0 0.0
  %455 = vmatpush1.xpose.msra.mxu0 0.0
  %456 = vmatprep.subr.mxu0 0.0
  %457 = vmatpush1.xpose.msra.mxu0 0.0
  %458 = vmatprep.subr.mxu0 0.0
  %459 = vmatpush1.xpose.msra.mxu0 0.0
  %460 = vmatprep.subr.mxu0 0.0
  %461 = vmatpush1.xpose.msra.mxu0 0.0
  %462 = vmatprep.subr.mxu0 0.0
  %463 = vmatpush1.xpose.msra.mxu0 0.0
  %464 = vmatprep.subr.mxu0 0.0
  %465 = vmatpush1.xpose.msra.mxu0 0.0
  %466 = vmatprep.mubr.f32.mxu0 0.0
  %467 = vmatmul.mubr.f32.gmra.mrb[0].mxu0 %v398
  %v468 = vpop.f32.mrb[0].mxu0
  %v469 = vadd.f32 0.0, %v468
  %v470 = vpop.f32.mrb[0].mxu0
  %471 = vdwg.mxu0
  %472 = vrot.lane.b32.xlu0 %v160, 96
  %v473 = vpop.permute.xlu0 %472
  %v474 = vsel %vm169, %v160, 0
  %v476 = vsel %vm169, %v473, 0
  %478 = vmatprep.subr.mxu0 0.0
  %479 = vmatpush1.xpose.msra.mxu0 %v476
  %480 = vmatprep.subr.mxu0 0.0
  %481 = vmatpush1.xpose.msra.mxu0 0.0
  %482 = vmatprep.subr.mxu0 0.0
  %483 = vmatpush1.xpose.msra.mxu0 0.0
  %484 = vmatprep.subr.mxu0 0.0
  %485 = vmatpush1.xpose.msra.mxu0 0.0
  %486 = vmatprep.subr.mxu0 0.0
  %487 = vmatpush1.xpose.msra.mxu0 0.0
  %488 = vmatprep.subr.mxu0 0.0
  %489 = vmatpush1.xpose.msra.mxu0 0.0
  %490 = vmatprep.subr.mxu0 0.0
  %491 = vmatpush1.xpose.msra.mxu0 0.0
  %492 = vmatprep.subr.mxu0 0.0
  %493 = vmatpush1.xpose.msra.mxu0 0.0
  %494 = vmatprep.subr.mxu0 0.0
  %495 = vmatpush1.xpose.msra.mxu0 0.0
  %496 = vmatprep.subr.mxu0 0.0
  %497 = vmatpush1.xpose.msra.mxu0 0.0
  %498 = vmatprep.subr.mxu0 0.0
  %499 = vmatpush1.xpose.msra.mxu0 0.0
  %500 = vmatprep.subr.mxu0 0.0
  %501 = vmatpush1.xpose.msra.mxu0 0.0
  %502 = vmatprep.subr.mxu0 0.0
  %503 = vmatpush1.xpose.msra.mxu0 0.0
  %504 = vmatprep.subr.mxu0 0.0
  %505 = vmatpush1.xpose.msra.mxu0 0.0
  %506 = vmatprep.subr.mxu0 0.0
  %507 = vmatpush1.xpose.msra.mxu0 0.0
  %508 = vmatprep.subr.mxu0 0.0
  %509 = vmatpush1.xpose.msra.mxu0 0.0
  %510 = vmatprep.subr.mxu0 0.0
  %511 = vmatpush1.xpose.msra.mxu0 0.0
  %512 = vmatprep.subr.mxu0 0.0
  %513 = vmatpush1.xpose.msra.mxu0 0.0
  %514 = vmatprep.subr.mxu0 0.0
  %515 = vmatpush1.xpose.msra.mxu0 0.0
  %516 = vmatprep.subr.mxu0 0.0
  %517 = vmatpush1.xpose.msra.mxu0 0.0
  %518 = vmatprep.subr.mxu0 0.0
  %519 = vmatpush1.xpose.msra.mxu0 0.0
  %520 = vmatprep.subr.mxu0 0.0
  %521 = vmatpush1.xpose.msra.mxu0 0.0
  %522 = vmatprep.subr.mxu0 0.0
  %523 = vmatpush1.xpose.msra.mxu0 0.0
  %524 = vmatprep.subr.mxu0 0.0
  %525 = vmatpush1.xpose.msra.mxu0 0.0
  %526 = vmatprep.subr.mxu0 0.0
  %527 = vmatpush1.xpose.msra.mxu0 0.0
  %528 = vmatprep.subr.mxu0 0.0
  %529 = vmatpush1.xpose.msra.mxu0 0.0
  %530 = vmatprep.subr.mxu0 0.0
  %531 = vmatpush1.xpose.msra.mxu0 0.0
  %532 = vmatprep.subr.mxu0 0.0
  %533 = vmatpush1.xpose.msra.mxu0 0.0
  %534 = vmatprep.subr.mxu0 0.0
  %535 = vmatpush1.xpose.msra.mxu0 0.0
  %536 = vmatprep.subr.mxu0 0.0
  %537 = vmatpush1.xpose.msra.mxu0 0.0
  %538 = vmatprep.subr.mxu0 0.0
  %539 = vmatpush1.xpose.msra.mxu0 0.0
  %540 = vmatprep.subr.mxu0 0.0
  %541 = vmatpush1.xpose.msra.mxu0 0.0
  %542 = vmatprep.mubr.f32.mxu0 0.0
  %543 = vmatmul.mubr.f32.gmra.mrb[0].mxu0 %v474
  %v544 = vpop.f32.mrb[0].mxu0
  %v545 = vadd.f32 0.0, %v544
  %v546 = vpop.f32.mrb[0].mxu0
  %547 = vdwg.mxu0
  %548 = vrot.lane.b32.xlu0 %v162, 96
  %v549 = vpop.permute.xlu0 %548
  %v550 = vsel %vm169, %v162, 0
  %v552 = vsel %vm169, %v549, 0
  %554 = vmatprep.subr.mxu0 0.0
  %555 = vmatpush1.xpose.msra.mxu0 %v552
  %556 = vmatprep.subr.mxu0 0.0
  %557 = vmatpush1.xpose.msra.mxu0 0.0
  %558 = vmatprep.subr.mxu0 0.0
  %559 = vmatpush1.xpose.msra.mxu0 0.0
  %560 = vmatprep.subr.mxu0 0.0
  %561 = vmatpush1.xpose.msra.mxu0 0.0
  %562 = vmatprep.subr.mxu0 0.0
  %563 = vmatpush1.xpose.msra.mxu0 0.0
  %564 = vmatprep.subr.mxu0 0.0
  %565 = vmatpush1.xpose.msra.mxu0 0.0
  %566 = vmatprep.subr.mxu0 0.0
  %567 = vmatpush1.xpose.msra.mxu0 0.0
  %568 = vmatprep.subr.mxu0 0.0
  %569 = vmatpush1.xpose.msra.mxu0 0.0
  %570 = vmatprep.subr.mxu0 0.0
  %571 = vmatpush1.xpose.msra.mxu0 0.0
  %572 = vmatprep.subr.mxu0 0.0
  %573 = vmatpush1.xpose.msra.mxu0 0.0
  %574 = vmatprep.subr.mxu0 0.0
  %575 = vmatpush1.xpose.msra.mxu0 0.0
  %576 = vmatprep.subr.mxu0 0.0
  %577 = vmatpush1.xpose.msra.mxu0 0.0
  %578 = vmatprep.subr.mxu0 0.0
  %579 = vmatpush1.xpose.msra.mxu0 0.0
  %580 = vmatprep.subr.mxu0 0.0
  %581 = vmatpush1.xpose.msra.mxu0 0.0
  %582 = vmatprep.subr.mxu0 0.0
  %583 = vmatpush1.xpose.msra.mxu0 0.0
  %584 = vmatprep.subr.mxu0 0.0
  %585 = vmatpush1.xpose.msra.mxu0 0.0
  %586 = vmatprep.subr.mxu0 0.0
  %587 = vmatpush1.xpose.msra.mxu0 0.0
  %588 = vmatprep.subr.mxu0 0.0
  %589 = vmatpush1.xpose.msra.mxu0 0.0
  %590 = vmatprep.subr.mxu0 0.0
  %591 = vmatpush1.xpose.msra.mxu0 0.0
  %592 = vmatprep.subr.mxu0 0.0
  %593 = vmatpush1.xpose.msra.mxu0 0.0
  %594 = vmatprep.subr.mxu0 0.0
  %595 = vmatpush1.xpose.msra.mxu0 0.0
  %596 = vmatprep.subr.mxu0 0.0
  %597 = vmatpush1.xpose.msra.mxu0 0.0
  %598 = vmatprep.subr.mxu0 0.0
  %599 = vmatpush1.xpose.msra.mxu0 0.0
  %600 = vmatprep.subr.mxu0 0.0
  %601 = vmatpush1.xpose.msra.mxu0 0.0
  %602 = vmatprep.subr.mxu0 0.0
  %603 = vmatpush1.xpose.msra.mxu0 0.0
  %604 = vmatprep.subr.mxu0 0.0
  %605 = vmatpush1.xpose.msra.mxu0 0.0
  %606 = vmatprep.subr.mxu0 0.0
  %607 = vmatpush1.xpose.msra.mxu0 0.0
  %608 = vmatprep.subr.mxu0 0.0
  %609 = vmatpush1.xpose.msra.mxu0 0.0
  %610 = vmatprep.subr.mxu0 0.0
  %611 = vmatpush1.xpose.msra.mxu0 0.0
  %612 = vmatprep.subr.mxu0 0.0
  %613 = vmatpush1.xpose.msra.mxu0 0.0
  %614 = vmatprep.subr.mxu0 0.0
  %615 = vmatpush1.xpose.msra.mxu0 0.0
  %616 = vmatprep.subr.mxu0 0.0
  %617 = vmatpush1.xpose.msra.mxu0 0.0
  %618 = vmatprep.mubr.f32.mxu0 0.0
  %619 = vmatmul.mubr.f32.gmra.mrb[0].mxu0 %v550
  %v620 = vpop.f32.mrb[0].mxu0
  %v621 = vadd.f32 0.0, %v620
  %v622 = vpop.f32.mrb[0].mxu0
  %623 = vdwg.mxu0
  %624 = vrot.lane.b32.xlu0 %v164, 96
  %v625 = vpop.permute.xlu0 %624
  %v626 = vsel %vm169, %v164, 0
  %v628 = vsel %vm169, %v625, 0
  %630 = vmatprep.subr.mxu0 0.0
  %631 = vmatpush1.xpose.msra.mxu0 %v628
  %632 = vmatprep.subr.mxu0 0.0
  %633 = vmatpush1.xpose.msra.mxu0 0.0
  %634 = vmatprep.subr.mxu0 0.0
  %635 = vmatpush1.xpose.msra.mxu0 0.0
  %636 = vmatprep.subr.mxu0 0.0
  %637 = vmatpush1.xpose.msra.mxu0 0.0
  %638 = vmatprep.subr.mxu0 0.0
  %639 = vmatpush1.xpose.msra.mxu0 0.0
  %640 = vmatprep.subr.mxu0 0.0
  %641 = vmatpush1.xpose.msra.mxu0 0.0
  %642 = vmatprep.subr.mxu0 0.0
  %643 = vmatpush1.xpose.msra.mxu0 0.0
  %644 = vmatprep.subr.mxu0 0.0
  %645 = vmatpush1.xpose.msra.mxu0 0.0
  %646 = vmatprep.subr.mxu0 0.0
  %647 = vmatpush1.xpose.msra.mxu0 0.0
  %648 = vmatprep.subr.mxu0 0.0
  %649 = vmatpush1.xpose.msra.mxu0 0.0
  %650 = vmatprep.subr.mxu0 0.0
  %651 = vmatpush1.xpose.msra.mxu0 0.0
  %652 = vmatprep.subr.mxu0 0.0
  %653 = vmatpush1.xpose.msra.mxu0 0.0
  %654 = vmatprep.subr.mxu0 0.0
  %655 = vmatpush1.xpose.msra.mxu0 0.0
  %656 = vmatprep.subr.mxu0 0.0
  %657 = vmatpush1.xpose.msra.mxu0 0.0
  %658 = vmatprep.subr.mxu0 0.0
  %659 = vmatpush1.xpose.msra.mxu0 0.0
  %660 = vmatprep.subr.mxu0 0.0
  %661 = vmatpush1.xpose.msra.mxu0 0.0
  %662 = vmatprep.subr.mxu0 0.0
  %663 = vmatpush1.xpose.msra.mxu0 0.0
  %664 = vmatprep.subr.mxu0 0.0
  %665 = vmatpush1.xpose.msra.mxu0 0.0
  %666 = vmatprep.subr.mxu0 0.0
  %667 = vmatpush1.xpose.msra.mxu0 0.0
  %668 = vmatprep.subr.mxu0 0.0
  %669 = vmatpush1.xpose.msra.mxu0 0.0
  %670 = vmatprep.subr.mxu0 0.0
  %671 = vmatpush1.xpose.msra.mxu0 0.0
  %672 = vmatprep.subr.mxu0 0.0
  %673 = vmatpush1.xpose.msra.mxu0 0.0
  %674 = vmatprep.subr.mxu0 0.0
  %675 = vmatpush1.xpose.msra.mxu0 0.0
  %676 = vmatprep.subr.mxu0 0.0
  %677 = vmatpush1.xpose.msra.mxu0 0.0
  %678 = vmatprep.subr.mxu0 0.0
  %679 = vmatpush1.xpose.msra.mxu0 0.0
  %680 = vmatprep.subr.mxu0 0.0
  %681 = vmatpush1.xpose.msra.mxu0 0.0
  %682 = vmatprep.subr.mxu0 0.0
  %683 = vmatpush1.xpose.msra.mxu0 0.0
  %684 = vmatprep.subr.mxu0 0.0
  %685 = vmatpush1.xpose.msra.mxu0 0.0
  %686 = vmatprep.subr.mxu0 0.0
  %687 = vmatpush1.xpose.msra.mxu0 0.0
  %688 = vmatprep.subr.mxu0 0.0
  %689 = vmatpush1.xpose.msra.mxu0 0.0
  %690 = vmatprep.subr.mxu0 0.0
  %691 = vmatpush1.xpose.msra.mxu0 0.0
  %692 = vmatprep.subr.mxu0 0.0
  %693 = vmatpush1.xpose.msra.mxu0 0.0
  %694 = vmatprep.mubr.f32.mxu0 0.0
  %695 = vmatmul.mubr.f32.gmra.mrb[0].mxu0 %v626
  %v696 = vpop.f32.mrb[0].mxu0
  %v697 = vadd.f32 0.0, %v696
  %v698 = vpop.f32.mrb[0].mxu0
  %699 = vdwg.mxu0
  %700 = vrot.lane.b32.xlu0 %v166, 96
  %v701 = vpop.permute.xlu0 %700
  %v702 = vsel %vm169, %v166, 0
  %v704 = vsel %vm169, %v701, 0
  %706 = vmatprep.subr.mxu0 0.0
  %707 = vmatpush1.xpose.msra.mxu0 %v704
  %708 = vmatprep.subr.mxu0 0.0
  %709 = vmatpush1.xpose.msra.mxu0 0.0
  %710 = vmatprep.subr.mxu0 0.0
  %711 = vmatpush1.xpose.msra.mxu0 0.0
  %712 = vmatprep.subr.mxu0 0.0
  %713 = vmatpush1.xpose.msra.mxu0 0.0
  %714 = vmatprep.subr.mxu0 0.0
  %715 = vmatpush1.xpose.msra.mxu0 0.0
  %716 = vmatprep.subr.mxu0 0.0
  %717 = vmatpush1.xpose.msra.mxu0 0.0
  %718 = vmatprep.subr.mxu0 0.0
  %719 = vmatpush1.xpose.msra.mxu0 0.0
  %720 = vmatprep.subr.mxu0 0.0
  %721 = vmatpush1.xpose.msra.mxu0 0.0
  %722 = vmatprep.subr.mxu0 0.0
  %723 = vmatpush1.xpose.msra.mxu0 0.0
  %724 = vmatprep.subr.mxu0 0.0
  %725 = vmatpush1.xpose.msra.mxu0 0.0
  %726 = vmatprep.subr.mxu0 0.0
  %727 = vmatpush1.xpose.msra.mxu0 0.0
  %728 = vmatprep.subr.mxu0 0.0
  %729 = vmatpush1.xpose.msra.mxu0 0.0
  %730 = vmatprep.subr.mxu0 0.0
  %731 = vmatpush1.xpose.msra.mxu0 0.0
  %732 = vmatprep.subr.mxu0 0.0
  %733 = vmatpush1.xpose.msra.mxu0 0.0
  %734 = vmatprep.subr.mxu0 0.0
  %735 = vmatpush1.xpose.msra.mxu0 0.0
  %736 = vmatprep.subr.mxu0 0.0
  %737 = vmatpush1.xpose.msra.mxu0 0.0
  %738 = vmatprep.subr.mxu0 0.0
  %739 = vmatpush1.xpose.msra.mxu0 0.0
  %740 = vmatprep.subr.mxu0 0.0
  %741 = vmatpush1.xpose.msra.mxu0 0.0
  %742 = vmatprep.subr.mxu0 0.0
  %743 = vmatpush1.xpose.msra.mxu0 0.0
  %744 = vmatprep.subr.mxu0 0.0
  %745 = vmatpush1.xpose.msra.mxu0 0.0
  %746 = vmatprep.subr.mxu0 0.0
  %747 = vmatpush1.xpose.msra.mxu0 0.0
  %748 = vmatprep.subr.mxu0 0.0
  %749 = vmatpush1.xpose.msra.mxu0 0.0
  %750 = vmatprep.subr.mxu0 0.0
  %751 = vmatpush1.xpose.msra.mxu0 0.0
  %752 = vmatprep.subr.mxu0 0.0
  %753 = vmatpush1.xpose.msra.mxu0 0.0
  %754 = vmatprep.subr.mxu0 0.0
  %755 = vmatpush1.xpose.msra.mxu0 0.0
  %756 = vmatprep.subr.mxu0 0.0
  %757 = vmatpush1.xpose.msra.mxu0 0.0
  %758 = vmatprep.subr.mxu0 0.0
  %759 = vmatpush1.xpose.msra.mxu0 0.0
  %760 = vmatprep.subr.mxu0 0.0
  %761 = vmatpush1.xpose.msra.mxu0 0.0
  %762 = vmatprep.subr.mxu0 0.0
  %763 = vmatpush1.xpose.msra.mxu0 0.0
  %764 = vmatprep.subr.mxu0 0.0
  %765 = vmatpush1.xpose.msra.mxu0 0.0
  %766 = vmatprep.subr.mxu0 0.0
  %767 = vmatpush1.xpose.msra.mxu0 0.0
  %768 = vmatprep.subr.mxu0 0.0
  %769 = vmatpush1.xpose.msra.mxu0 0.0
  %770 = vmatprep.mubr.f32.mxu0 0.0
  %771 = vmatmul.mubr.f32.gmra.mrb[0].mxu0 %v702
  %v772 = vpop.f32.mrb[0].mxu0
  %v773 = vadd.f32 0.0, %v772
  %v774 = vpop.f32.mrb[0].mxu0
  %775 = vdwg.mxu0
  %v776 = vmul.f32 %v241, 0.35355338
  %v777 = vmul.f32 %v317, 0.35355338
  %v778 = vmul.f32 %v393, 0.35355338
  %v779 = vmul.f32 %v469, 0.35355338
  %v780 = vmul.f32 %v545, 0.35355338
  %v781 = vmul.f32 %v621, 0.35355338
  %v782 = vmul.f32 %v697, 0.35355338
  %v783 = vmul.f32 %v773, 0.35355338
  %v784 = vsel %vm169, %v776, -inf
  %785 = vmax.xlane.f32.xlu0 %v784
  %v786 = vpop.xlane.xlu0 %785
  %v787 = vsel %vm169, %v777, -inf
  %788 = vmax.xlane.f32.xlu0 %v787
  %v789 = vpop.xlane.xlu0 %788
  %v790 = vsel %vm169, %v778, -inf
  %791 = vmax.xlane.f32.xlu0 %v790
  %v792 = vpop.xlane.xlu0 %791
  %v793 = vsel %vm169, %v779, -inf
  %794 = vmax.xlane.f32.xlu0 %v793
  %v795 = vpop.xlane.xlu0 %794
  %v796 = vsel %vm169, %v780, -inf
  %797 = vmax.xlane.f32.xlu0 %v796
  %v798 = vpop.xlane.xlu0 %797
  %v799 = vsel %vm169, %v781, -inf
  %800 = vmax.xlane.f32.xlu0 %v799
  %v801 = vpop.xlane.xlu0 %800
  %v802 = vsel %vm169, %v782, -inf
  %803 = vmax.xlane.f32.xlu0 %v802
  %v804 = vpop.xlane.xlu0 %803
  %v805 = vsel %vm169, %v783, -inf
  %806 = vmax.xlane.f32.xlu0 %v805
  %v807 = vpop.xlane.xlu0 %806
  %v808 = vsub.f32 %v776, %v786
  %v809 = vsub.f32 %v777, %v789
  %v810 = vsub.f32 %v778, %v792
  %v811 = vsub.f32 %v779, %v795
  %v812 = vsub.f32 %v780, %v798
  %v813 = vsub.f32 %v781, %v801
  %v814 = vsub.f32 %v782, %v804
  %v815 = vsub.f32 %v783, %v807
  %v816 = vmul.f32 %v808, 1.442695
  %v817 = vpow.pop %v816
  %v818 = vmul.f32 %v809, 1.442695
  %v819 = vpow.pop %v818
  %v820 = vmul.f32 %v810, 1.442695
  %v821 = vpow.pop %v820
  %v822 = vmul.f32 %v811, 1.442695
  %v823 = vpow.pop %v822
  %v824 = vmul.f32 %v812, 1.442695
  %v825 = vpow.pop %v824
  %v826 = vmul.f32 %v813, 1.442695
  %v827 = vpow.pop %v826
  %v828 = vmul.f32 %v814, 1.442695
  %v829 = vpow.pop %v828
  %v830 = vmul.f32 %v815, 1.442695
  %v831 = vpow.pop %v830
  %v832 = vsel %vm169, %v817, 0.0
  %833 = vadd.xlane.f32.xlu0 %v832
  %v834 = vpop.xlane.xlu0 %833
  %v835 = vsel %vm169, %v819, 0.0
  %836 = vadd.xlane.f32.xlu0 %v835
  %v837 = vpop.xlane.xlu0 %836
  %v838 = vsel %vm169, %v821, 0.0
  %839 = vadd.xlane.f32.xlu0 %v838
  %v840 = vpop.xlane.xlu0 %839
  %v841 = vsel %vm169, %v823, 0.0
  %842 = vadd.xlane.f32.xlu0 %v841
  %v843 = vpop.xlane.xlu0 %842
  %v844 = vsel %vm169, %v825, 0.0
  %845 = vadd.xlane.f32.xlu0 %v844
  %v846 = vpop.xlane.xlu0 %845
  %v847 = vsel %vm169, %v827, 0.0
  %848 = vadd.xlane.f32.xlu0 %v847
  %v849 = vpop.xlane.xlu0 %848
  %v850 = vsel %vm169, %v829, 0.0
  %851 = vadd.xlane.f32.xlu0 %v850
  %v852 = vpop.xlane.xlu0 %851
  %v853 = vsel %vm169, %v831, 0.0
  %854 = vadd.xlane.f32.xlu0 %v853
  %v855 = vpop.xlane.xlu0 %854
  %v856 = vrcp.pop %v834
  %v857 = vrcp.pop %v837
  %v858 = vrcp.pop %v840
  %v859 = vrcp.pop %v843
  %v860 = vrcp.pop %v846
  %v861 = vrcp.pop %v849
  %v862 = vrcp.pop %v852
  %v863 = vrcp.pop %v855
  %v864 = vmul.f32 %v834, %v856
  %v865 = vmul.f32 %v837, %v857
  %v866 = vmul.f32 %v840, %v858
  %v867 = vmul.f32 %v843, %v859
  %v868 = vmul.f32 %v846, %v860
  %v869 = vmul.f32 %v849, %v861
  %v870 = vmul.f32 %v852, %v862
  %v871 = vmul.f32 %v855, %v863
  %v872 = vsub.f32 2.0, %v864
  %v873 = vsub.f32 2.0, %v865
  %v874 = vsub.f32 2.0, %v866
  %v875 = vsub.f32 2.0, %v867
  %v876 = vsub.f32 2.0, %v868
  %v877 = vsub.f32 2.0, %v869
  %v878 = vsub.f32 2.0, %v870
  %v879 = vsub.f32 2.0, %v871
  %v880 = vmul.f32 %v856, %v872
  %v881 = vmul.f32 %v857, %v873
  %v882 = vmul.f32 %v858, %v874
  %v883 = vmul.f32 %v859, %v875
  %v884 = vmul.f32 %v860, %v876
  %v885 = vmul.f32 %v861, %v877
  %v886 = vmul.f32 %v862, %v878
  %v887 = vmul.f32 %v863, %v879
  %v888 = vmul.f32 %v817, %v880
  %v889 = vmul.f32 %v819, %v881
  %v890 = vmul.f32 %v821, %v882
  %v891 = vmul.f32 %v823, %v883
  %v892 = vmul.f32 %v825, %v884
  %v893 = vmul.f32 %v827, %v885
  %v894 = vmul.f32 %v829, %v886
  %v895 = vmul.f32 %v831, %v887
  %897 = vrot.lane.b32.xlu0 %v889, 8
  %v898 = vpop.permute.xlu0 %897
  %901 = vrot.lane.b32.xlu0 %v890, 16
  %v902 = vpop.permute.xlu0 %901
  %905 = vrot.lane.b32.xlu0 %v891, 24
  %v906 = vpop.permute.xlu0 %905
  %909 = vrot.lane.b32.xlu0 %v892, 32
  %v910 = vpop.permute.xlu0 %909
  %913 = vrot.lane.b32.xlu0 %v893, 40
  %v914 = vpop.permute.xlu0 %913
  %917 = vrot.lane.b32.xlu0 %v894, 48
  %v918 = vpop.permute.xlu0 %917
  %921 = vrot.lane.b32.xlu0 %v895, 56
  %v922 = vpop.permute.xlu0 %921
  %v924 = vsel %vm169, %v888, %v898
  %vm925 = vcmask 130048
  %v926 = vsel %vm925, %v924, %v902
  %vm927 = vcmask 195584
  %v928 = vsel %vm927, %v926, %v906
  %v929 = vsel %vm28, %v928, %v910
  %vm930 = vcmask 326656
  %v931 = vsel %vm930, %v929, %v914
  %vm932 = vcmask 392192
  %v933 = vsel %vm932, %v931, %v918
  %vm934 = vcmask 457728
  %v935 = vsel %vm934, %v933, %v922
  %v937 = vrot.slane %v935, 4
  %938 = vrot.lane.b32.xlu0 %v937, 64
  %v939 = vpop.permute.xlu0 %938
  %vm941 = vcmask 523264
  %v942 = vsel %vm941, %v935, %v939
  %943 = vst [vmem:[%s7] sm:$0xf] %v942
  %944 = vrot.lane.b32.xlu0 %v145, 64
  %v945 = vpop.permute.xlu0 %944
  %v948 = vsel %vm169, %v888, 0
  %950 = vmatprep.subr.mxu0 0.0
  %951 = vmatpush1.msra.mxu0 %v945
  %952 = vmatprep.subr.mxu0 0.0
  %953 = vmatpush1.msra.mxu0 0.0
  %954 = vmatprep.subr.mxu0 0.0
  %955 = vmatpush1.msra.mxu0 0.0
  %956 = vmatprep.subr.mxu0 0.0
  %957 = vmatpush1.msra.mxu0 0.0
  %958 = vmatprep.subr.mxu0 0.0
  %959 = vmatpush1.msra.mxu0 0.0
  %960 = vmatprep.subr.mxu0 0.0
  %961 = vmatpush1.msra.mxu0 0.0
  %962 = vmatprep.subr.mxu0 0.0
  %963 = vmatpush1.msra.mxu0 0.0
  %964 = vmatprep.subr.mxu0 0.0
  %965 = vmatpush1.msra.mxu0 0.0
  %966 = vmatprep.subr.mxu0 0.0
  %967 = vmatpush1.msra.mxu0 0.0
  %968 = vmatprep.subr.mxu0 0.0
  %969 = vmatpush1.msra.mxu0 0.0
  %970 = vmatprep.subr.mxu0 0.0
  %971 = vmatpush1.msra.mxu0 0.0
  %972 = vmatprep.subr.mxu0 0.0
  %973 = vmatpush1.msra.mxu0 0.0
  %974 = vmatprep.subr.mxu0 0.0
  %975 = vmatpush1.msra.mxu0 0.0
  %976 = vmatprep.subr.mxu0 0.0
  %977 = vmatpush1.msra.mxu0 0.0
  %978 = vmatprep.subr.mxu0 0.0
  %979 = vmatpush1.msra.mxu0 0.0
  %980 = vmatprep.subr.mxu0 0.0
  %981 = vmatpush1.msra.mxu0 0.0
  %982 = vmatprep.subr.mxu0 0.0
  %983 = vmatpush1.msra.mxu0 0.0
  %984 = vmatprep.subr.mxu0 0.0
  %985 = vmatpush1.msra.mxu0 0.0
  %986 = vmatprep.subr.mxu0 0.0
  %987 = vmatpush1.msra.mxu0 0.0
  %988 = vmatprep.subr.mxu0 0.0
  %989 = vmatpush1.msra.mxu0 0.0
  %990 = vmatprep.subr.mxu0 0.0
  %991 = vmatpush1.msra.mxu0 0.0
  %992 = vmatprep.subr.mxu0 0.0
  %993 = vmatpush1.msra.mxu0 0.0
  %994 = vmatprep.subr.mxu0 0.0
  %995 = vmatpush1.msra.mxu0 0.0
  %996 = vmatprep.subr.mxu0 0.0
  %997 = vmatpush1.msra.mxu0 0.0
  %998 = vmatprep.subr.mxu0 0.0
  %999 = vmatpush1.msra.mxu0 0.0
  %1000 = vmatprep.subr.mxu0 0.0
  %1001 = vmatpush1.msra.mxu0 0.0
  %1002 = vmatprep.subr.mxu0 0.0
  %1003 = vmatpush1.msra.mxu0 0.0
  %1004 = vmatprep.subr.mxu0 0.0
  %1005 = vmatpush1.msra.mxu0 0.0
  %1006 = vmatprep.subr.mxu0 0.0
  %1007 = vmatpush1.msra.mxu0 0.0
  %1008 = vmatprep.subr.mxu0 0.0
  %1009 = vmatpush1.msra.mxu0 0.0
  %1010 = vmatprep.subr.mxu0 0.0
  %1011 = vmatpush1.msra.mxu0 0.0
  %1012 = vmatprep.subr.mxu0 0.0
  %1013 = vmatpush1.msra.mxu0 0.0
  %1014 = vmatprep.mubr.f32.mxu0 0.0
  %1015 = vmatmul.mubr.f32.gmra.mrb[0].mxu0 %v948
  %v1016 = vpop.f32.mrb[0].mxu0
  %v1017 = vadd.f32 0.0, %v1016
  %v1018 = vpop.f32.mrb[0].mxu0
  %1019 = vdwg.mxu0
  %1020 = vrot.lane.b32.xlu0 %v150, 64
  %v1021 = vpop.permute.xlu0 %1020
  %v1023 = vsel %vm169, %v889, 0
  %1025 = vmatprep.subr.mxu0 0.0
  %1026 = vmatpush1.msra.mxu0 %v1021
  %1027 = vmatprep.subr.mxu0 0.0
  %1028 = vmatpush1.msra.mxu0 0.0
  %1029 = vmatprep.subr.mxu0 0.0
  %1030 = vmatpush1.msra.mxu0 0.0
  %1031 = vmatprep.subr.mxu0 0.0
  %1032 = vmatpush1.msra.mxu0 0.0
  %1033 = vmatprep.subr.mxu0 0.0
  %1034 = vmatpush1.msra.mxu0 0.0
  %1035 = vmatprep.subr.mxu0 0.0
  %1036 = vmatpush1.msra.mxu0 0.0
  %1037 = vmatprep.subr.mxu0 0.0
  %1038 = vmatpush1.msra.mxu0 0.0
  %1039 = vmatprep.subr.mxu0 0.0
  %1040 = vmatpush1.msra.mxu0 0.0
  %1041 = vmatprep.subr.mxu0 0.0
  %1042 = vmatpush1.msra.mxu0 0.0
  %1043 = vmatprep.subr.mxu0 0.0
  %1044 = vmatpush1.msra.mxu0 0.0
  %1045 = vmatprep.subr.mxu0 0.0
  %1046 = vmatpush1.msra.mxu0 0.0
  %1047 = vmatprep.subr.mxu0 0.0
  %1048 = vmatpush1.msra.mxu0 0.0
  %1049 = vmatprep.subr.mxu0 0.0
  %1050 = vmatpush1.msra.mxu0 0.0
  %1051 = vmatprep.subr.mxu0 0.0
  %1052 = vmatpush1.msra.mxu0 0.0
  %1053 = vmatprep.subr.mxu0 0.0
  %1054 = vmatpush1.msra.mxu0 0.0
  %1055 = vmatprep.subr.mxu0 0.0
  %1056 = vmatpush1.msra.mxu0 0.0
  %1057 = vmatprep.subr.mxu0 0.0
  %1058 = vmatpush1.msra.mxu0 0.0
  %1059 = vmatprep.subr.mxu0 0.0
  %1060 = vmatpush1.msra.mxu0 0.0
  %1061 = vmatprep.subr.mxu0 0.0
  %1062 = vmatpush1.msra.mxu0 0.0
  %1063 = vmatprep.subr.mxu0 0.0
  %1064 = vmatpush1.msra.mxu0 0.0
  %1065 = vmatprep.subr.mxu0 0.0
  %1066 = vmatpush1.msra.mxu0 0.0
  %1067 = vmatprep.subr.mxu0 0.0
  %1068 = vmatpush1.msra.mxu0 0.0
  %1069 = vmatprep.subr.mxu0 0.0
  %1070 = vmatpush1.msra.mxu0 0.0
  %1071 = vmatprep.subr.mxu0 0.0
  %1072 = vmatpush1.msra.mxu0 0.0
  %1073 = vmatprep.subr.mxu0 0.0
  %1074 = vmatpush1.msra.mxu0 0.0
  %1075 = vmatprep.subr.mxu0 0.0
  %1076 = vmatpush1.msra.mxu0 0.0
  %1077 = vmatprep.subr.mxu0 0.0
  %1078 = vmatpush1.msra.mxu0 0.0
  %1079 = vmatprep.subr.mxu0 0.0
  %1080 = vmatpush1.msra.mxu0 0.0
  %1081 = vmatprep.subr.mxu0 0.0
  %1082 = vmatpush1.msra.mxu0 0.0
  %1083 = vmatprep.subr.mxu0 0.0
  %1084 = vmatpush1.msra.mxu0 0.0
  %1085 = vmatprep.subr.mxu0 0.0
  %1086 = vmatpush1.msra.mxu0 0.0
  %1087 = vmatprep.subr.mxu0 0.0
  %1088 = vmatpush1.msra.mxu0 0.0
  %1089 = vmatprep.mubr.f32.mxu0 0.0
  %1090 = vmatmul.mubr.f32.gmra.mrb[0].mxu0 %v1023
  %v1091 = vpop.f32.mrb[0].mxu0
  %v1092 = vadd.f32 0.0, %v1091
  %v1093 = vpop.f32.mrb[0].mxu0
  %1094 = vdwg.mxu0
  %1095 = vrot.lane.b32.xlu0 %v156, 64
  %v1096 = vpop.permute.xlu0 %1095
  %v1098 = vsel %vm169, %v890, 0
  %1100 = vmatprep.subr.mxu0 0.0
  %1101 = vmatpush1.msra.mxu0 %v1096
  %1102 = vmatprep.subr.mxu0 0.0
  %1103 = vmatpush1.msra.mxu0 0.0
  %1104 = vmatprep.subr.mxu0 0.0
  %1105 = vmatpush1.msra.mxu0 0.0
  %1106 = vmatprep.subr.mxu0 0.0
  %1107 = vmatpush1.msra.mxu0 0.0
  %1108 = vmatprep.subr.mxu0 0.0
  %1109 = vmatpush1.msra.mxu0 0.0
  %1110 = vmatprep.subr.mxu0 0.0
  %1111 = vmatpush1.msra.mxu0 0.0
  %1112 = vmatprep.subr.mxu0 0.0
  %1113 = vmatpush1.msra.mxu0 0.0
  %1114 = vmatprep.subr.mxu0 0.0
  %1115 = vmatpush1.msra.mxu0 0.0
  %1116 = vmatprep.subr.mxu0 0.0
  %1117 = vmatpush1.msra.mxu0 0.0
  %1118 = vmatprep.subr.mxu0 0.0
  %1119 = vmatpush1.msra.mxu0 0.0
  %1120 = vmatprep.subr.mxu0 0.0
  %1121 = vmatpush1.msra.mxu0 0.0
  %1122 = vmatprep.subr.mxu0 0.0
  %1123 = vmatpush1.msra.mxu0 0.0
  %1124 = vmatprep.subr.mxu0 0.0
  %1125 = vmatpush1.msra.mxu0 0.0
  %1126 = vmatprep.subr.mxu0 0.0
  %1127 = vmatpush1.msra.mxu0 0.0
  %1128 = vmatprep.subr.mxu0 0.0
  %1129 = vmatpush1.msra.mxu0 0.0
  %1130 = vmatprep.subr.mxu0 0.0
  %1131 = vmatpush1.msra.mxu0 0.0
  %1132 = vmatprep.subr.mxu0 0.0
  %1133 = vmatpush1.msra.mxu0 0.0
  %1134 = vmatprep.subr.mxu0 0.0
  %1135 = vmatpush1.msra.mxu0 0.0
  %1136 = vmatprep.subr.mxu0 0.0
  %1137 = vmatpush1.msra.mxu0 0.0
  %1138 = vmatprep.subr.mxu0 0.0
  %1139 = vmatpush1.msra.mxu0 0.0
  %1140 = vmatprep.subr.mxu0 0.0
  %1141 = vmatpush1.msra.mxu0 0.0
  %1142 = vmatprep.subr.mxu0 0.0
  %1143 = vmatpush1.msra.mxu0 0.0
  %1144 = vmatprep.subr.mxu0 0.0
  %1145 = vmatpush1.msra.mxu0 0.0
  %1146 = vmatprep.subr.mxu0 0.0
  %1147 = vmatpush1.msra.mxu0 0.0
  %1148 = vmatprep.subr.mxu0 0.0
  %1149 = vmatpush1.msra.mxu0 0.0
  %1150 = vmatprep.subr.mxu0 0.0
  %1151 = vmatpush1.msra.mxu0 0.0
  %1152 = vmatprep.subr.mxu0 0.0
  %1153 = vmatpush1.msra.mxu0 0.0
  %1154 = vmatprep.subr.mxu0 0.0
  %1155 = vmatpush1.msra.mxu0 0.0
  %1156 = vmatprep.subr.mxu0 0.0
  %1157 = vmatpush1.msra.mxu0 0.0
  %1158 = vmatprep.subr.mxu0 0.0
  %1159 = vmatpush1.msra.mxu0 0.0
  %1160 = vmatprep.subr.mxu0 0.0
  %1161 = vmatpush1.msra.mxu0 0.0
  %1162 = vmatprep.subr.mxu0 0.0
  %1163 = vmatpush1.msra.mxu0 0.0
  %1164 = vmatprep.mubr.f32.mxu0 0.0
  %1165 = vmatmul.mubr.f32.gmra.mrb[0].mxu0 %v1098
  %v1166 = vpop.f32.mrb[0].mxu0
  %v1167 = vadd.f32 0.0, %v1166
  %v1168 = vpop.f32.mrb[0].mxu0
  %1169 = vdwg.mxu0
  %1170 = vrot.lane.b32.xlu0 %v158, 64
  %v1171 = vpop.permute.xlu0 %1170
  %v1173 = vsel %vm169, %v891, 0
  %1175 = vmatprep.subr.mxu0 0.0
  %1176 = vmatpush1.msra.mxu0 %v1171
  %1177 = vmatprep.subr.mxu0 0.0
  %1178 = vmatpush1.msra.mxu0 0.0
  %1179 = vmatprep.subr.mxu0 0.0
  %1180 = vmatpush1.msra.mxu0 0.0
  %1181 = vmatprep.subr.mxu0 0.0
  %1182 = vmatpush1.msra.mxu0 0.0
  %1183 = vmatprep.subr.mxu0 0.0
  %1184 = vmatpush1.msra.mxu0 0.0
  %1185 = vmatprep.subr.mxu0 0.0
  %1186 = vmatpush1.msra.mxu0 0.0
  %1187 = vmatprep.subr.mxu0 0.0
  %1188 = vmatpush1.msra.mxu0 0.0
  %1189 = vmatprep.subr.mxu0 0.0
  %1190 = vmatpush1.msra.mxu0 0.0
  %1191 = vmatprep.subr.mxu0 0.0
  %1192 = vmatpush1.msra.mxu0 0.0
  %1193 = vmatprep.subr.mxu0 0.0
  %1194 = vmatpush1.msra.mxu0 0.0
  %1195 = vmatprep.subr.mxu0 0.0
  %1196 = vmatpush1.msra.mxu0 0.0
  %1197 = vmatprep.subr.mxu0 0.0
  %1198 = vmatpush1.msra.mxu0 0.0
  %1199 = vmatprep.subr.mxu0 0.0
  %1200 = vmatpush1.msra.mxu0 0.0
  %1201 = vmatprep.subr.mxu0 0.0
  %1202 = vmatpush1.msra.mxu0 0.0
  %1203 = vmatprep.subr.mxu0 0.0
  %1204 = vmatpush1.msra.mxu0 0.0
  %1205 = vmatprep.subr.mxu0 0.0
  %1206 = vmatpush1.msra.mxu0 0.0
  %1207 = vmatprep.subr.mxu0 0.0
  %1208 = vmatpush1.msra.mxu0 0.0
  %1209 = vmatprep.subr.mxu0 0.0
  %1210 = vmatpush1.msra.mxu0 0.0
  %1211 = vmatprep.subr.mxu0 0.0
  %1212 = vmatpush1.msra.mxu0 0.0
  %1213 = vmatprep.subr.mxu0 0.0
  %1214 = vmatpush1.msra.mxu0 0.0
  %1215 = vmatprep.subr.mxu0 0.0
  %1216 = vmatpush1.msra.mxu0 0.0
  %1217 = vmatprep.subr.mxu0 0.0
  %1218 = vmatpush1.msra.mxu0 0.0
  %1219 = vmatprep.subr.mxu0 0.0
  %1220 = vmatpush1.msra.mxu0 0.0
  %1221 = vmatprep.subr.mxu0 0.0
  %1222 = vmatpush1.msra.mxu0 0.0
  %1223 = vmatprep.subr.mxu0 0.0
  %1224 = vmatpush1.msra.mxu0 0.0
  %1225 = vmatprep.subr.mxu0 0.0
  %1226 = vmatpush1.msra.mxu0 0.0
  %1227 = vmatprep.subr.mxu0 0.0
  %1228 = vmatpush1.msra.mxu0 0.0
  %1229 = vmatprep.subr.mxu0 0.0
  %1230 = vmatpush1.msra.mxu0 0.0
  %1231 = vmatprep.subr.mxu0 0.0
  %1232 = vmatpush1.msra.mxu0 0.0
  %1233 = vmatprep.subr.mxu0 0.0
  %1234 = vmatpush1.msra.mxu0 0.0
  %1235 = vmatprep.subr.mxu0 0.0
  %1236 = vmatpush1.msra.mxu0 0.0
  %1237 = vmatprep.subr.mxu0 0.0
  %1238 = vmatpush1.msra.mxu0 0.0
  %1239 = vmatprep.mubr.f32.mxu0 0.0
  %1240 = vmatmul.mubr.f32.gmra.mrb[0].mxu0 %v1173
  %v1241 = vpop.f32.mrb[0].mxu0
  %v1242 = vadd.f32 0.0, %v1241
  %v1243 = vpop.f32.mrb[0].mxu0
  %1244 = vdwg.mxu0
  %1245 = vrot.lane.b32.xlu0 %v160, 64
  %v1246 = vpop.permute.xlu0 %1245
  %v1248 = vsel %vm169, %v892, 0
  %1250 = vmatprep.subr.mxu0 0.0
  %1251 = vmatpush1.msra.mxu0 %v1246
  %1252 = vmatprep.subr.mxu0 0.0
  %1253 = vmatpush1.msra.mxu0 0.0
  %1254 = vmatprep.subr.mxu0 0.0
  %1255 = vmatpush1.msra.mxu0 0.0
  %1256 = vmatprep.subr.mxu0 0.0
  %1257 = vmatpush1.msra.mxu0 0.0
  %1258 = vmatprep.subr.mxu0 0.0
  %1259 = vmatpush1.msra.mxu0 0.0
  %1260 = vmatprep.subr.mxu0 0.0
  %1261 = vmatpush1.msra.mxu0 0.0
  %1262 = vmatprep.subr.mxu0 0.0
  %1263 = vmatpush1.msra.mxu0 0.0
  %1264 = vmatprep.subr.mxu0 0.0
  %1265 = vmatpush1.msra.mxu0 0.0
  %1266 = vmatprep.subr.mxu0 0.0
  %1267 = vmatpush1.msra.mxu0 0.0
  %1268 = vmatprep.subr.mxu0 0.0
  %1269 = vmatpush1.msra.mxu0 0.0
  %1270 = vmatprep.subr.mxu0 0.0
  %1271 = vmatpush1.msra.mxu0 0.0
  %1272 = vmatprep.subr.mxu0 0.0
  %1273 = vmatpush1.msra.mxu0 0.0
  %1274 = vmatprep.subr.mxu0 0.0
  %1275 = vmatpush1.msra.mxu0 0.0
  %1276 = vmatprep.subr.mxu0 0.0
  %1277 = vmatpush1.msra.mxu0 0.0
  %1278 = vmatprep.subr.mxu0 0.0
  %1279 = vmatpush1.msra.mxu0 0.0
  %1280 = vmatprep.subr.mxu0 0.0
  %1281 = vmatpush1.msra.mxu0 0.0
  %1282 = vmatprep.subr.mxu0 0.0
  %1283 = vmatpush1.msra.mxu0 0.0
  %1284 = vmatprep.subr.mxu0 0.0
  %1285 = vmatpush1.msra.mxu0 0.0
  %1286 = vmatprep.subr.mxu0 0.0
  %1287 = vmatpush1.msra.mxu0 0.0
  %1288 = vmatprep.subr.mxu0 0.0
  %1289 = vmatpush1.msra.mxu0 0.0
  %1290 = vmatprep.subr.mxu0 0.0
  %1291 = vmatpush1.msra.mxu0 0.0
  %1292 = vmatprep.subr.mxu0 0.0
  %1293 = vmatpush1.msra.mxu0 0.0
  %1294 = vmatprep.subr.mxu0 0.0
  %1295 = vmatpush1.msra.mxu0 0.0
  %1296 = vmatprep.subr.mxu0 0.0
  %1297 = vmatpush1.msra.mxu0 0.0
  %1298 = vmatprep.subr.mxu0 0.0
  %1299 = vmatpush1.msra.mxu0 0.0
  %1300 = vmatprep.subr.mxu0 0.0
  %1301 = vmatpush1.msra.mxu0 0.0
  %1302 = vmatprep.subr.mxu0 0.0
  %1303 = vmatpush1.msra.mxu0 0.0
  %1304 = vmatprep.subr.mxu0 0.0
  %1305 = vmatpush1.msra.mxu0 0.0
  %1306 = vmatprep.subr.mxu0 0.0
  %1307 = vmatpush1.msra.mxu0 0.0
  %1308 = vmatprep.subr.mxu0 0.0
  %1309 = vmatpush1.msra.mxu0 0.0
  %1310 = vmatprep.subr.mxu0 0.0
  %1311 = vmatpush1.msra.mxu0 0.0
  %1312 = vmatprep.subr.mxu0 0.0
  %1313 = vmatpush1.msra.mxu0 0.0
  %1314 = vmatprep.mubr.f32.mxu0 0.0
  %1315 = vmatmul.mubr.f32.gmra.mrb[0].mxu0 %v1248
  %v1316 = vpop.f32.mrb[0].mxu0
  %v1317 = vadd.f32 0.0, %v1316
  %v1318 = vpop.f32.mrb[0].mxu0
  %1319 = vdwg.mxu0
  %1320 = vrot.lane.b32.xlu0 %v162, 64
  %v1321 = vpop.permute.xlu0 %1320
  %v1323 = vsel %vm169, %v893, 0
  %1325 = vmatprep.subr.mxu0 0.0
  %1326 = vmatpush1.msra.mxu0 %v1321
  %1327 = vmatprep.subr.mxu0 0.0
  %1328 = vmatpush1.msra.mxu0 0.0
  %1329 = vmatprep.subr.mxu0 0.0
  %1330 = vmatpush1.msra.mxu0 0.0
  %1331 = vmatprep.subr.mxu0 0.0
  %1332 = vmatpush1.msra.mxu0 0.0
  %1333 = vmatprep.subr.mxu0 0.0
  %1334 = vmatpush1.msra.mxu0 0.0
  %1335 = vmatprep.subr.mxu0 0.0
  %1336 = vmatpush1.msra.mxu0 0.0
  %1337 = vmatprep.subr.mxu0 0.0
  %1338 = vmatpush1.msra.mxu0 0.0
  %1339 = vmatprep.subr.mxu0 0.0
  %1340 = vmatpush1.msra.mxu0 0.0
  %1341 = vmatprep.subr.mxu0 0.0
  %1342 = vmatpush1.msra.mxu0 0.0
  %1343 = vmatprep.subr.mxu0 0.0
  %1344 = vmatpush1.msra.mxu0 0.0
  %1345 = vmatprep.subr.mxu0 0.0
  %1346 = vmatpush1.msra.mxu0 0.0
  %1347 = vmatprep.subr.mxu0 0.0
  %1348 = vmatpush1.msra.mxu0 0.0
  %1349 = vmatprep.subr.mxu0 0.0
  %1350 = vmatpush1.msra.mxu0 0.0
  %1351 = vmatprep.subr.mxu0 0.0
  %1352 = vmatpush1.msra.mxu0 0.0
  %1353 = vmatprep.subr.mxu0 0.0
  %1354 = vmatpush1.msra.mxu0 0.0
  %1355 = vmatprep.subr.mxu0 0.0
  %1356 = vmatpush1.msra.mxu0 0.0
  %1357 = vmatprep.subr.mxu0 0.0
  %1358 = vmatpush1.msra.mxu0 0.0
  %1359 = vmatprep.subr.mxu0 0.0
  %1360 = vmatpush1.msra.mxu0 0.0
  %1361 = vmatprep.subr.mxu0 0.0
  %1362 = vmatpush1.msra.mxu0 0.0
  %1363 = vmatprep.subr.mxu0 0.0
  %1364 = vmatpush1.msra.mxu0 0.0
  %1365 = vmatprep.subr.mxu0 0.0
  %1366 = vmatpush1.msra.mxu0 0.0
  %1367 = vmatprep.subr.mxu0 0.0
  %1368 = vmatpush1.msra.mxu0 0.0
  %1369 = vmatprep.subr.mxu0 0.0
  %1370 = vmatpush1.msra.mxu0 0.0
  %1371 = vmatprep.subr.mxu0 0.0
  %1372 = vmatpush1.msra.mxu0 0.0
  %1373 = vmatprep.subr.mxu0 0.0
  %1374 = vmatpush1.msra.mxu0 0.0
  %1375 = vmatprep.subr.mxu0 0.0
  %1376 = vmatpush1.msra.mxu0 0.0
  %1377 = vmatprep.subr.mxu0 0.0
  %1378 = vmatpush1.msra.mxu0 0.0
  %1379 = vmatprep.subr.mxu0 0.0
  %1380 = vmatpush1.msra.mxu0 0.0
  %1381 = vmatprep.subr.mxu0 0.0
  %1382 = vmatpush1.msra.mxu0 0.0
  %1383 = vmatprep.subr.mxu0 0.0
  %1384 = vmatpush1.msra.mxu0 0.0
  %1385 = vmatprep.subr.mxu0 0.0
  %1386 = vmatpush1.msra.mxu0 0.0
  %1387 = vmatprep.subr.mxu0 0.0
  %1388 = vmatpush1.msra.mxu0 0.0
  %1389 = vmatprep.mubr.f32.mxu0 0.0
  %1390 = vmatmul.mubr.f32.gmra.mrb[0].mxu0 %v1323
  %v1391 = vpop.f32.mrb[0].mxu0
  %v1392 = vadd.f32 0.0, %v1391
  %v1393 = vpop.f32.mrb[0].mxu0
  %1394 = vdwg.mxu0
  %1395 = vrot.lane.b32.xlu0 %v164, 64
  %v1396 = vpop.permute.xlu0 %1395
  %v1398 = vsel %vm169, %v894, 0
  %1400 = vmatprep.subr.mxu0 0.0
  %1401 = vmatpush1.msra.mxu0 %v1396
  %1402 = vmatprep.subr.mxu0 0.0
  %1403 = vmatpush1.msra.mxu0 0.0
  %1404 = vmatprep.subr.mxu0 0.0
  %1405 = vmatpush1.msra.mxu0 0.0
  %1406 = vmatprep.subr.mxu0 0.0
  %1407 = vmatpush1.msra.mxu0 0.0
  %1408 = vmatprep.subr.mxu0 0.0
  %1409 = vmatpush1.msra.mxu0 0.0
  %1410 = vmatprep.subr.mxu0 0.0
  %1411 = vmatpush1.msra.mxu0 0.0
  %1412 = vmatprep.subr.mxu0 0.0
  %1413 = vmatpush1.msra.mxu0 0.0
  %1414 = vmatprep.subr.mxu0 0.0
  %1415 = vmatpush1.msra.mxu0 0.0
  %1416 = vmatprep.subr.mxu0 0.0
  %1417 = vmatpush1.msra.mxu0 0.0
  %1418 = vmatprep.subr.mxu0 0.0
  %1419 = vmatpush1.msra.mxu0 0.0
  %1420 = vmatprep.subr.mxu0 0.0
  %1421 = vmatpush1.msra.mxu0 0.0
  %1422 = vmatprep.subr.mxu0 0.0
  %1423 = vmatpush1.msra.mxu0 0.0
  %1424 = vmatprep.subr.mxu0 0.0
  %1425 = vmatpush1.msra.mxu0 0.0
  %1426 = vmatprep.subr.mxu0 0.0
  %1427 = vmatpush1.msra.mxu0 0.0
  %1428 = vmatprep.subr.mxu0 0.0
  %1429 = vmatpush1.msra.mxu0 0.0
  %1430 = vmatprep.subr.mxu0 0.0
  %1431 = vmatpush1.msra.mxu0 0.0
  %1432 = vmatprep.subr.mxu0 0.0
  %1433 = vmatpush1.msra.mxu0 0.0
  %1434 = vmatprep.subr.mxu0 0.0
  %1435 = vmatpush1.msra.mxu0 0.0
  %1436 = vmatprep.subr.mxu0 0.0
  %1437 = vmatpush1.msra.mxu0 0.0
  %1438 = vmatprep.subr.mxu0 0.0
  %1439 = vmatpush1.msra.mxu0 0.0
  %1440 = vmatprep.subr.mxu0 0.0
  %1441 = vmatpush1.msra.mxu0 0.0
  %1442 = vmatprep.subr.mxu0 0.0
  %1443 = vmatpush1.msra.mxu0 0.0
  %1444 = vmatprep.subr.mxu0 0.0
  %1445 = vmatpush1.msra.mxu0 0.0
  %1446 = vmatprep.subr.mxu0 0.0
  %1447 = vmatpush1.msra.mxu0 0.0
  %1448 = vmatprep.subr.mxu0 0.0
  %1449 = vmatpush1.msra.mxu0 0.0
  %1450 = vmatprep.subr.mxu0 0.0
  %1451 = vmatpush1.msra.mxu0 0.0
  %1452 = vmatprep.subr.mxu0 0.0
  %1453 = vmatpush1.msra.mxu0 0.0
  %1454 = vmatprep.subr.mxu0 0.0
  %1455 = vmatpush1.msra.mxu0 0.0
  %1456 = vmatprep.subr.mxu0 0.0
  %1457 = vmatpush1.msra.mxu0 0.0
  %1458 = vmatprep.subr.mxu0 0.0
  %1459 = vmatpush1.msra.mxu0 0.0
  %1460 = vmatprep.subr.mxu0 0.0
  %1461 = vmatpush1.msra.mxu0 0.0
  %1462 = vmatprep.subr.mxu0 0.0
  %1463 = vmatpush1.msra.mxu0 0.0
  %1464 = vmatprep.mubr.f32.mxu0 0.0
  %1465 = vmatmul.mubr.f32.gmra.mrb[0].mxu0 %v1398
  %v1466 = vpop.f32.mrb[0].mxu0
  %v1467 = vadd.f32 0.0, %v1466
  %v1468 = vpop.f32.mrb[0].mxu0
  %1469 = vdwg.mxu0
  %1470 = vrot.lane.b32.xlu0 %v166, 64
  %v1471 = vpop.permute.xlu0 %1470
  %v1473 = vsel %vm169, %v895, 0
  %1475 = vmatprep.subr.mxu0 0.0
  %1476 = vmatpush1.msra.mxu0 %v1471
  %1477 = vmatprep.subr.mxu0 0.0
  %1478 = vmatpush1.msra.mxu0 0.0
  %1479 = vmatprep.subr.mxu0 0.0
  %1480 = vmatpush1.msra.mxu0 0.0
  %1481 = vmatprep.subr.mxu0 0.0
  %1482 = vmatpush1.msra.mxu0 0.0
  %1483 = vmatprep.subr.mxu0 0.0
  %1484 = vmatpush1.msra.mxu0 0.0
  %1485 = vmatprep.subr.mxu0 0.0
  %1486 = vmatpush1.msra.mxu0 0.0
  %1487 = vmatprep.subr.mxu0 0.0
  %1488 = vmatpush1.msra.mxu0 0.0
  %1489 = vmatprep.subr.mxu0 0.0
  %1490 = vmatpush1.msra.mxu0 0.0
  %1491 = vmatprep.subr.mxu0 0.0
  %1492 = vmatpush1.msra.mxu0 0.0
  %1493 = vmatprep.subr.mxu0 0.0
  %1494 = vmatpush1.msra.mxu0 0.0
  %1495 = vmatprep.subr.mxu0 0.0
  %1496 = vmatpush1.msra.mxu0 0.0
  %1497 = vmatprep.subr.mxu0 0.0
  %1498 = vmatpush1.msra.mxu0 0.0
  %1499 = vmatprep.subr.mxu0 0.0
  %1500 = vmatpush1.msra.mxu0 0.0
  %1501 = vmatprep.subr.mxu0 0.0
  %1502 = vmatpush1.msra.mxu0 0.0
  %1503 = vmatprep.subr.mxu0 0.0
  %1504 = vmatpush1.msra.mxu0 0.0
  %1505 = vmatprep.subr.mxu0 0.0
  %1506 = vmatpush1.msra.mxu0 0.0
  %1507 = vmatprep.subr.mxu0 0.0
  %1508 = vmatpush1.msra.mxu0 0.0
  %1509 = vmatprep.subr.mxu0 0.0
  %1510 = vmatpush1.msra.mxu0 0.0
  %1511 = vmatprep.subr.mxu0 0.0
  %1512 = vmatpush1.msra.mxu0 0.0
  %1513 = vmatprep.subr.mxu0 0.0
  %1514 = vmatpush1.msra.mxu0 0.0
  %1515 = vmatprep.subr.mxu0 0.0
  %1516 = vmatpush1.msra.mxu0 0.0
  %1517 = vmatprep.subr.mxu0 0.0
  %1518 = vmatpush1.msra.mxu0 0.0
  %1519 = vmatprep.subr.mxu0 0.0
  %1520 = vmatpush1.msra.mxu0 0.0
  %1521 = vmatprep.subr.mxu0 0.0
  %1522 = vmatpush1.msra.mxu0 0.0
  %1523 = vmatprep.subr.mxu0 0.0
  %1524 = vmatpush1.msra.mxu0 0.0
  %1525 = vmatprep.subr.mxu0 0.0
  %1526 = vmatpush1.msra.mxu0 0.0
  %1527 = vmatprep.subr.mxu0 0.0
  %1528 = vmatpush1.msra.mxu0 0.0
  %1529 = vmatprep.subr.mxu0 0.0
  %1530 = vmatpush1.msra.mxu0 0.0
  %1531 = vmatprep.subr.mxu0 0.0
  %1532 = vmatpush1.msra.mxu0 0.0
  %1533 = vmatprep.subr.mxu0 0.0
  %1534 = vmatpush1.msra.mxu0 0.0
  %1535 = vmatprep.subr.mxu0 0.0
  %1536 = vmatpush1.msra.mxu0 0.0
  %1537 = vmatprep.subr.mxu0 0.0
  %1538 = vmatpush1.msra.mxu0 0.0
  %1539 = vmatprep.mubr.f32.mxu0 0.0
  %1540 = vmatmul.mubr.f32.gmra.mrb[0].mxu0 %v1473
  %v1541 = vpop.f32.mrb[0].mxu0
  %v1542 = vadd.f32 0.0, %v1541
  %v1543 = vpop.f32.mrb[0].mxu0
  %1544 = vdwg.mxu0
  %1547 = vrot.lane.b32.xlu0 %v1167, 8
  %v1548 = vpop.permute.xlu0 %1547
  %1549 = vrot.lane.b32.xlu0 %v1242, 8
  %v1550 = vpop.permute.xlu0 %1549
  %1555 = vrot.lane.b32.xlu0 %v1317, 16
  %v1556 = vpop.permute.xlu0 %1555
  %1557 = vrot.lane.b32.xlu0 %v1392, 16
  %v1558 = vpop.permute.xlu0 %1557
  %1563 = vrot.lane.b32.xlu0 %v1467, 24
  %v1564 = vpop.permute.xlu0 %1563
  %1565 = vrot.lane.b32.xlu0 %v1542, 24
  %v1566 = vpop.permute.xlu0 %1565
  %v1569 = vsel %vm169, %v1017, %v1548
  %v1570 = vsel %vm169, %v1092, %v1550
  %v1571 = vsel %vm925, %v1569, %v1556
  %v1572 = vsel %vm925, %v1570, %v1558
  %v1573 = vsel %vm927, %v1571, %v1564
  %v1574 = vsel %vm927, %v1572, %v1566
  %v1575 = vld [vmem:[%s3] sm:$0xff]
  %v1576 = vld [vmem:[%s3 + $0x8] sm:$0xff]
  %v1577 = vld [vmem:[%s3 + $0x10] sm:$0xff]
  %v1578 = vld [vmem:[%s3 + $0x18] sm:$0xff]
  %v1579 = vlaneseq
  %v1580 = vshrl.u32 %v1579, 7
  %v1581 = vsub.s32 2, %v1580
  %v1582 = vrot.slane %v27, %v1581
  %v1584 = vsel %vm28, %v1573, 0
  %v1587 = vsel %vm28, %v1574, 0
  %1589 = vmatprep.subr.mxu0 0.0
  %1590 = vmatpush1.msra.mxu0 %v1575
  %1591 = vmatprep.subr.mxu0 0.0
  %1592 = vmatpush1.msra.mxu0 %v1576
  %1593 = vmatprep.subr.mxu0 0.0
  %1594 = vmatpush1.msra.mxu0 %v1577
  %1595 = vmatprep.subr.mxu0 0.0
  %1596 = vmatpush1.msra.mxu0 %v1578
  %1597 = vmatprep.subr.mxu0 0.0
  %1598 = vmatpush1.msra.mxu0 0.0
  %1599 = vmatprep.subr.mxu0 0.0
  %1600 = vmatpush1.msra.mxu0 0.0
  %1601 = vmatprep.subr.mxu0 0.0
  %1602 = vmatpush1.msra.mxu0 0.0
  %1603 = vmatprep.subr.mxu0 0.0
  %1604 = vmatpush1.msra.mxu0 0.0
  %1605 = vmatprep.subr.mxu0 0.0
  %1606 = vmatpush1.msra.mxu0 0.0
  %1607 = vmatprep.subr.mxu0 0.0
  %1608 = vmatpush1.msra.mxu0 0.0
  %1609 = vmatprep.subr.mxu0 0.0
  %1610 = vmatpush1.msra.mxu0 0.0
  %1611 = vmatprep.subr.mxu0 0.0
  %1612 = vmatpush1.msra.mxu0 0.0
  %1613 = vmatprep.subr.mxu0 0.0
  %1614 = vmatpush1.msra.mxu0 0.0
  %1615 = vmatprep.subr.mxu0 0.0
  %1616 = vmatpush1.msra.mxu0 0.0
  %1617 = vmatprep.subr.mxu0 0.0
  %1618 = vmatpush1.msra.mxu0 0.0
  %1619 = vmatprep.subr.mxu0 0.0
  %1620 = vmatpush1.msra.mxu0 0.0
  %1621 = vmatprep.subr.mxu0 0.0
  %1622 = vmatpush1.msra.mxu0 0.0
  %1623 = vmatprep.subr.mxu0 0.0
  %1624 = vmatpush1.msra.mxu0 0.0
  %1625 = vmatprep.subr.mxu0 0.0
  %1626 = vmatpush1.msra.mxu0 0.0
  %1627 = vmatprep.subr.mxu0 0.0
  %1628 = vmatpush1.msra.mxu0 0.0
  %1629 = vmatprep.subr.mxu0 0.0
  %1630 = vmatpush1.msra.mxu0 0.0
  %1631 = vmatprep.subr.mxu0 0.0
  %1632 = vmatpush1.msra.mxu0 0.0
  %1633 = vmatprep.subr.mxu0 0.0
  %1634 = vmatpush1.msra.mxu0 0.0
  %1635 = vmatprep.subr.mxu0 0.0
  %1636 = vmatpush1.msra.mxu0 0.0
  %1637 = vmatprep.subr.mxu0 0.0
  %1638 = vmatpush1.msra.mxu0 0.0
  %1639 = vmatprep.subr.mxu0 0.0
  %1640 = vmatpush1.msra.mxu0 0.0
  %1641 = vmatprep.subr.mxu0 0.0
  %1642 = vmatpush1.msra.mxu0 0.0
  %1643 = vmatprep.subr.mxu0 0.0
  %1644 = vmatpush1.msra.mxu0 0.0
  %1645 = vmatprep.subr.mxu0 0.0
  %1646 = vmatpush1.msra.mxu0 0.0
  %1647 = vmatprep.subr.mxu0 0.0
  %1648 = vmatpush1.msra.mxu0 0.0
  %1649 = vmatprep.subr.mxu0 0.0
  %1650 = vmatpush1.msra.mxu0 0.0
  %1651 = vmatprep.subr.mxu0 0.0
  %1652 = vmatpush1.msra.mxu0 0.0
  %1653 = vmatprep.mubr.f32.mxu0 0.0
  %1654 = vmatmul.mubr.f32.gmra.mrb[0].mxu0 %v1584
  %v1655 = vpop.f32.mrb[0].mxu0
  %v1656 = vadd.f32 %v1582, %v1655
  %v1657 = vpop.f32.mrb[0].mxu0
  %1658 = vmatprep.mubr.f32.mxu0 0.0
  %1659 = vmatmul.mubr.f32.gmra.mrb[0].mxu0 %v1587
  %v1660 = vpop.f32.mrb[0].mxu0
  %v1661 = vadd.f32 %v1582, %v1660
  %v1662 = vpop.f32.mrb[0].mxu0
  %1663 = vdwg.mxu0
  %v1664 = vadd.f32 %v25, %v1656
  %v1665 = vadd.f32 %v26, %v1661
  %v1666 = vsel %vm28, %v1664, 0.0
  %1667 = vadd.xlane.f32.xlu0 %v1666
  %v1668 = vpop.xlane.xlu0 %1667
  %v1669 = vsel %vm28, %v1665, 0.0
  %1670 = vadd.xlane.f32.xlu0 %v1669
  %v1671 = vpop.xlane.xlu0 %1670
  %v1672 = vmul.f32 %v1668, %v35
  %v1673 = vmul.f32 %v1671, %v35
  %v1674 = vsub.f32 %v1664, %v1672
  %v1675 = vsub.f32 %v1665, %v1673
  %v1676 = vmul.f32 %v1674, %v1674
  %v1677 = vmul.f32 %v1675, %v1675
  %v1678 = vsel %vm28, %v1676, 0.0
  %1679 = vadd.xlane.f32.xlu0 %v1678
  %v1680 = vpop.xlane.xlu0 %1679
  %v1681 = vsel %vm28, %v1677, 0.0
  %1682 = vadd.xlane.f32.xlu0 %v1681
  %v1683 = vpop.xlane.xlu0 %1682
  %v1684 = vmul.f32 %v1680, %v35
  %v1685 = vmul.f32 %v1683, %v35
  %v1686 = vadd.f32 %v1684, 1e-06
  %v1687 = vadd.f32 %v1685, 1e-06
  %v1688 = vrsqrt.pop %v1686
  %v1689 = vrsqrt.pop %v1687
  %v1690 = vmul.f32 %v1674, %v1688
  %v1691 = vmul.f32 %v1675, %v1689
  %v1692 = vlaneseq
  %v1693 = vshrl.u32 %v1692, 7
  %v1694 = vsub.s32 3, %v1693
  %v1695 = vrot.slane %v27, %v1694
  %v1696 = vmul.f32 %v1690, %v1695
  %v1697 = vmul.f32 %v1691, %v1695
  %v1698 = vlaneseq
  %v1699 = vshrl.u32 %v1698, 7
  %v1700 = vsub.s32 4, %v1699
  %v1701 = vrot.slane %v27, %v1700
  %v1702 = vadd.f32 %v1696, %v1701
  %v1703 = vadd.f32 %v1697, %v1701
  %v1704 = vld [vmem:[%s4] sm:$0xff]
  %v1705 = vld [vmem:[%s4 + $0x8] sm:$0xff]
  %v1706 = vld [vmem:[%s4 + $0x10] sm:$0xff]
  %v1707 = vld [vmem:[%s4 + $0x18] sm:$0xff]
  %v1708 = vlaneseq
  %v1709 = vshrl.u32 %v1708, 7
  %v1710 = vsub.s32 6, %v1709
  %v1711 = vrot.slane %v27, %v1710
  %v1713 = vsel %vm28, %v1702, 0
  %v1716 = vsel %vm28, %v1703, 0
  %1718 = vmatprep.subr.mxu0 0.0
  %1719 = vmatpush1.msra.mxu0 %v1704
  %1720 = vmatprep.subr.mxu0 0.0
  %1721 = vmatpush1.msra.mxu0 %v1705
  %1722 = vmatprep.subr.mxu0 0.0
  %1723 = vmatpush1.msra.mxu0 %v1706
  %1724 = vmatprep.subr.mxu0 0.0
  %1725 = vmatpush1.msra.mxu0 %v1707
  %1726 = vmatprep.subr.mxu0 0.0
  %1727 = vmatpush1.msra.mxu0 0.0
  %1728 = vmatprep.subr.mxu0 0.0
  %1729 = vmatpush1.msra.mxu0 0.0
  %1730 = vmatprep.subr.mxu0 0.0
  %1731 = vmatpush1.msra.mxu0 0.0
  %1732 = vmatprep.subr.mxu0 0.0
  %1733 = vmatpush1.msra.mxu0 0.0
  %1734 = vmatprep.subr.mxu0 0.0
  %1735 = vmatpush1.msra.mxu0 0.0
  %1736 = vmatprep.subr.mxu0 0.0
  %1737 = vmatpush1.msra.mxu0 0.0
  %1738 = vmatprep.subr.mxu0 0.0
  %1739 = vmatpush1.msra.mxu0 0.0
  %1740 = vmatprep.subr.mxu0 0.0
  %1741 = vmatpush1.msra.mxu0 0.0
  %1742 = vmatprep.subr.mxu0 0.0
  %1743 = vmatpush1.msra.mxu0 0.0
  %1744 = vmatprep.subr.mxu0 0.0
  %1745 = vmatpush1.msra.mxu0 0.0
  %1746 = vmatprep.subr.mxu0 0.0
  %1747 = vmatpush1.msra.mxu0 0.0
  %1748 = vmatprep.subr.mxu0 0.0
  %1749 = vmatpush1.msra.mxu0 0.0
  %1750 = vmatprep.subr.mxu0 0.0
  %1751 = vmatpush1.msra.mxu0 0.0
  %1752 = vmatprep.subr.mxu0 0.0
  %1753 = vmatpush1.msra.mxu0 0.0
  %1754 = vmatprep.subr.mxu0 0.0
  %1755 = vmatpush1.msra.mxu0 0.0
  %1756 = vmatprep.subr.mxu0 0.0
  %1757 = vmatpush1.msra.mxu0 0.0
  %1758 = vmatprep.subr.mxu0 0.0
  %1759 = vmatpush1.msra.mxu0 0.0
  %1760 = vmatprep.subr.mxu0 0.0
  %1761 = vmatpush1.msra.mxu0 0.0
  %1762 = vmatprep.subr.mxu0 0.0
  %1763 = vmatpush1.msra.mxu0 0.0
  %1764 = vmatprep.subr.mxu0 0.0
  %1765 = vmatpush1.msra.mxu0 0.0
  %1766 = vmatprep.subr.mxu0 0.0
  %1767 = vmatpush1.msra.mxu0 0.0
  %1768 = vmatprep.subr.mxu0 0.0
  %1769 = vmatpush1.msra.mxu0 0.0
  %1770 = vmatprep.subr.mxu0 0.0
  %1771 = vmatpush1.msra.mxu0 0.0
  %1772 = vmatprep.subr.mxu0 0.0
  %1773 = vmatpush1.msra.mxu0 0.0
  %1774 = vmatprep.subr.mxu0 0.0
  %1775 = vmatpush1.msra.mxu0 0.0
  %1776 = vmatprep.subr.mxu0 0.0
  %1777 = vmatpush1.msra.mxu0 0.0
  %1778 = vmatprep.subr.mxu0 0.0
  %1779 = vmatpush1.msra.mxu0 0.0
  %1780 = vmatprep.subr.mxu0 0.0
  %1781 = vmatpush1.msra.mxu0 0.0
  %1782 = vmatprep.mubr.f32.mxu0 0.0
  %1783 = vmatmul.mubr.f32.gmra.mrb[0].mxu0 %v1713
  %v1784 = vpop.f32.mrb[0].mxu0
  %v1785 = vadd.f32 %v1711, %v1784
  %v1786 = vpop.f32.mrb[0].mxu0
  %1787 = vmatprep.mubr.f32.mxu0 0.0
  %1788 = vmatmul.mubr.f32.gmra.mrb[0].mxu0 %v1716
  %v1789 = vpop.f32.mrb[0].mxu0
  %v1790 = vadd.f32 %v1711, %v1789
  %v1791 = vpop.f32.mrb[0].mxu0
  %1792 = vdwg.mxu0
  %v1793 = vmul.f32 %v1785, 0.5
  %v1794 = vmul.f32 %v1790, 0.5
  %v1795 = vmul.f32 %v1785, 0.70710677
  %v1796 = vmul.f32 %v1790, 0.70710677
  %v1797 = verf.f32.pop %v1795
  %v1798 = verf.f32.pop %v1796
  %v1799 = vadd.f32 %v1797, 1.0
  %v1800 = vadd.f32 %v1798, 1.0
  %v1801 = vmul.f32 %v1793, %v1799
  %v1802 = vmul.f32 %v1794, %v1800
  %v1803 = vld [vmem:[%s5] sm:$0xff]
  %v1804 = vld [vmem:[%s5 + $0x8] sm:$0xff]
  %v1805 = vld [vmem:[%s5 + $0x10] sm:$0xff]
  %v1806 = vld [vmem:[%s5 + $0x18] sm:$0xff]
  %v1807 = vld [vmem:[%s5 + $0x20] sm:$0xff]
  %v1808 = vld [vmem:[%s5 + $0x28] sm:$0xff]
  %v1809 = vld [vmem:[%s5 + $0x30] sm:$0xff]
  %v1810 = vld [vmem:[%s5 + $0x38] sm:$0xff]
  %v1811 = vld [vmem:[%s5 + $0x40] sm:$0xff]
  %v1812 = vld [vmem:[%s5 + $0x48] sm:$0xff]
  %v1813 = vld [vmem:[%s5 + $0x50] sm:$0xff]
  %v1814 = vld [vmem:[%s5 + $0x58] sm:$0xff]
  %v1815 = vld [vmem:[%s5 + $0x60] sm:$0xff]
  %v1816 = vld [vmem:[%s5 + $0x68] sm:$0xff]
  %v1817 = vld [vmem:[%s5 + $0x70] sm:$0xff]
  %v1818 = vld [vmem:[%s5 + $0x78] sm:$0xff]
  %v1819 = vlaneseq
  %v1820 = vshrl.u32 %v1819, 7
  %v1821 = vsub.s32 5, %v1820
  %v1822 = vrot.slane %v27, %v1821
  %1823 = vmatprep.subr.mxu0 0.0
  %1824 = vmatpush1.msra.mxu0 %v1803
  %1825 = vmatprep.subr.mxu0 0.0
  %1826 = vmatpush1.msra.mxu0 %v1804
  %1827 = vmatprep.subr.mxu0 0.0
  %1828 = vmatpush1.msra.mxu0 %v1805
  %1829 = vmatprep.subr.mxu0 0.0
  %1830 = vmatpush1.msra.mxu0 %v1806
  %1831 = vmatprep.subr.mxu0 0.0
  %1832 = vmatpush1.msra.mxu0 %v1807
  %1833 = vmatprep.subr.mxu0 0.0
  %1834 = vmatpush1.msra.mxu0 %v1808
  %1835 = vmatprep.subr.mxu0 0.0
  %1836 = vmatpush1.msra.mxu0 %v1809
  %1837 = vmatprep.subr.mxu0 0.0
  %1838 = vmatpush1.msra.mxu0 %v1810
  %1839 = vmatprep.subr.mxu0 0.0
  %1840 = vmatpush1.msra.mxu0 %v1811
  %1841 = vmatprep.subr.mxu0 0.0
  %1842 = vmatpush1.msra.mxu0 %v1812
  %1843 = vmatprep.subr.mxu0 0.0
  %1844 = vmatpush1.msra.mxu0 %v1813
  %1845 = vmatprep.subr.mxu0 0.0
  %1846 = vmatpush1.msra.mxu0 %v1814
  %1847 = vmatprep.subr.mxu0 0.0
  %1848 = vmatpush1.msra.mxu0 %v1815
  %1849 = vmatprep.subr.mxu0 0.0
  %1850 = vmatpush1.msra.mxu0 %v1816
  %1851 = vmatprep.subr.mxu0 0.0
  %1852 = vmatpush1.msra.mxu0 %v1817
  %1853 = vmatprep.subr.mxu0 0.0
  %1854 = vmatpush1.msra.mxu0 %v1818
  %1855 = vmatprep.subr.mxu0 0.0
  %1856 = vmatpush1.msra.mxu0 0.0
  %1857 = vmatprep.subr.mxu0 0.0
  %1858 = vmatpush1.msra.mxu0 0.0
  %1859 = vmatprep.subr.mxu0 0.0
  %1860 = vmatpush1.msra.mxu0 0.0
  %1861 = vmatprep.subr.mxu0 0.0
  %1862 = vmatpush1.msra.mxu0 0.0
  %1863 = vmatprep.subr.mxu0 0.0
  %1864 = vmatpush1.msra.mxu0 0.0
  %1865 = vmatprep.subr.mxu0 0.0
  %1866 = vmatpush1.msra.mxu0 0.0
  %1867 = vmatprep.subr.mxu0 0.0
  %1868 = vmatpush1.msra.mxu0 0.0
  %1869 = vmatprep.subr.mxu0 0.0
  %1870 = vmatpush1.msra.mxu0 0.0
  %1871 = vmatprep.subr.mxu0 0.0
  %1872 = vmatpush1.msra.mxu0 0.0
  %1873 = vmatprep.subr.mxu0 0.0
  %1874 = vmatpush1.msra.mxu0 0.0
  %1875 = vmatprep.subr.mxu0 0.0
  %1876 = vmatpush1.msra.mxu0 0.0
  %1877 = vmatprep.subr.mxu0 0.0
  %1878 = vmatpush1.msra.mxu0 0.0
  %1879 = vmatprep.subr.mxu0 0.0
  %1880 = vmatpush1.msra.mxu0 0.0
  %1881 = vmatprep.subr.mxu0 0.0
  %1882 = vmatpush1.msra.mxu0 0.0
  %1883 = vmatprep.subr.mxu0 0.0
  %1884 = vmatpush1.msra.mxu0 0.0
  %1885 = vmatprep.subr.mxu0 0.0
  %1886 = vmatpush1.msra.mxu0 0.0
  %1887 = vmatprep.mubr.f32.mxu0 0.0
  %1888 = vmatmul.mubr.f32.gmra.mrb[0].mxu0 %v1801
  %v1889 = vpop.f32.mrb[0].mxu0
  %v1890 = vadd.f32 %v1822, %v1889
  %v1891 = vpop.f32.mrb[0].mxu0
  %1892 = vmatprep.mubr.f32.mxu0 0.0
  %1893 = vmatmul.mubr.f32.gmra.mrb[0].mxu0 %v1802
  %v1894 = vpop.f32.mrb[0].mxu0
  %v1895 = vadd.f32 %v1822, %v1894
  %v1896 = vpop.f32.mrb[0].mxu0
  %1897 = vdwg.mxu0
  %v1898 = vadd.f32 %v1664, %v1890
  %v1899 = vadd.f32 %v1665, %v1895
  %v1901 = vrot.slane %v1898, 4
  %1902 = vrot.lane.b32.xlu0 %v1901, 32
  %v1903 = vpop.permute.xlu0 %1902
  %1906 = vrot.lane.b32.xlu0 %v1899, 64
  %v1907 = vpop.permute.xlu0 %1906
  %v1909 = vrot.slane %v1899, 4
  %1910 = vrot.lane.b32.xlu0 %v1909, 96
  %v1911 = vpop.permute.xlu0 %1910
  %v1913 = vsel %vm28, %v1898, %v1903
  %v1914 = vsel %vm941, %v1913, %v1907
  %vm1915 = vcmask 785408
  %v1916 = vsel %vm1915, %v1914, %v1911
  %1917 = vst [vmem:[%s6] sm:$0xf] %v1916
  // Predicated region
  $region26: #{block_forward.1} parent=0 // pred_check
    _
  $region27: #{block_forward.1} parent=0 // pred_check_branch
    %1919 = sbr.rel (0) target = $region29
  $region28: #{block_forward.1} parent=0 // pred_region
    _
  $region29: #{block_forward.1} parent=0 // pred_fallthru
    _
  // Predicated region
  $region30: #{block_forward.1} parent=0 // pred_check
    _
  $region31: #{block_forward.1} parent=0 // pred_check_branch
    %1921 = sbr.rel (0) target = $region33
  $region32: #{block_forward.1} parent=0 // pred_region
    _
  $region33: #{block_forward.1} parent=0 // pred_fallthru
    _
  // Predicated region
  $region34: #{block_forward.1} parent=0 // pred_check
    _
  $region35: #{block_forward.1} parent=0 // pred_check_branch
    %1923 = sbr.rel (0) target = $region37
  $region36: #{block_forward.1} parent=0 // pred_region
    _
  $region37: #{block_forward.1} parent=0 // pred_fallthru
    _
  // Predicated region
  $region38: #{block_forward.1} parent=0 // pred_check
    _
  $region39: #{block_forward.1} parent=0 // pred_check_branch
    %1925 = sbr.rel (0) target = $region41
  $region40: #{block_forward.1} parent=0 // pred_region
    _
  $region41: #{block_forward.1} parent=0 // pred_fallthru
    _

</llo_original>
